<compile_context>
chip_gen: v7x
topology: tpu7x:2x2x1
jax: 0.10.0
libtpu: 0.0.40
codegen_flags: <defaults>
</compile_context>

<pallas_src>
import math
from functools import partial

import jax
import jax.numpy as jnp
from jax import lax
from jax.experimental import pallas as pl
from jax.experimental.pallas import tpu as pltpu

LN_EPS = 1e-6


# ------------------------------ in-kernel helpers ------------------------------

def _ln(x, alpha, bias, eps):
    """torch Norm: alpha*(x-mean)/(std_unbiased+eps)+bias over the last dim.
    Divide is a (rows,1) EUP reciprocal, not a full-tensor VALU divide."""
    d = x.shape[-1]
    mean = jnp.mean(x, axis=-1, keepdims=True)
    xc = x - mean
    var = jnp.sum(xc * xc, axis=-1, keepdims=True) * (1.0 / (d - 1))   # unbiased
    inv = pl.reciprocal(jnp.sqrt(var) + eps, approx=True)
    return alpha * (xc * inv) + bias


# ----------------------------- fused stack kernel ------------------------------

def _encoder_stack_kernel(x_ref, pe_ref, m_ref,
                          ln1a_ref, ln1b_ref, wqkv_ref, bqkv_ref, wo_ref, bo_ref,
                          ln2a_ref, ln2b_ref, w1_ref, b1_ref, w2_ref, b2_ref,
                          na_ref, nb_ref, wmv_ref, bmv_ref, eps_ref,
                          o_ref, x_sc,
                          *, bt, s_pad, h, dk, latent_dim, eps, variational):
    """grid = (B//Bt, N).  Batch blocks 'parallel', layers 'arbitrary'.
    x_sc (VMEM, (Bt*S_pad, D) f32) is the activation carry across layers."""
    n = pl.program_id(1)
    d_model = h * dk
    rows = bt * s_pad

    @pl.when(n == 0)
    def _():
        # fold positional-encoding add into the first layer step
        x0 = x_ref[...].astype(jnp.float32) + pe_ref[...]          # (Bt,S,D)+(1,S,D)
        x_sc[...] = x0.reshape(rows, d_model)

    x = x_sc[...]                                                   # (rows, D) f32
    mask_add = m_ref[...]                                           # (Bt, 1, S) additive

    # ---------- multi-head self-attention (pre-norm, residual) ----------
    xn = _ln(x, ln1a_ref[0], ln1b_ref[0], eps)
    qkv = (jnp.dot(xn.astype(jnp.bfloat16), wqkv_ref[0],
                   preferred_element_type=jnp.float32) + bqkv_ref[0])   # (rows, 3D)
    qkv = qkv.reshape(bt, s_pad, 3 * d_model)
    heads = []
    for hi in range(h):                                             # static unroll
        qh = qkv[:, :, hi * dk:(hi + 1) * dk].astype(jnp.bfloat16)
        kh = qkv[:, :, d_model + hi * dk: d_model + (hi + 1) * dk].astype(jnp.bfloat16)
        vh = qkv[:, :, 2 * d_model + hi * dk: 2 * d_model + (hi + 1) * dk].astype(jnp.bfloat16)
        # NT contraction (no explicit transpose); 1/sqrt(dk) folded into Wq.
        s = lax.dot_general(qh, kh, (((2,), (2,)), ((0,), (0,))),
                            preferred_element_type=jnp.float32)     # (Bt, S, S)
        s = s + mask_add
        s = s - jnp.max(s, axis=-1, keepdims=True)
        p = jnp.exp(s)
        p = p * pl.reciprocal(jnp.sum(p, axis=-1, keepdims=True), approx=True)
        heads.append(lax.dot_general(p.astype(jnp.bfloat16), vh,
                                     (((2,), (1,)), ((0,), (0,))),
                                     preferred_element_type=jnp.float32))  # (Bt,S,dk)
    attn = jnp.concatenate(heads, axis=-1).reshape(rows, d_model)   # stays in vregs
    x = x + (jnp.dot(attn.astype(jnp.bfloat16), wo_ref[0],
                     preferred_element_type=jnp.float32) + bo_ref[0])

    # ---------- feed-forward (pre-norm, residual); (rows, dff) never leaves VMEM ----------
    xn = _ln(x, ln2a_ref[0], ln2b_ref[0], eps)
    hmid = jnp.maximum(jnp.dot(xn.astype(jnp.bfloat16), w1_ref[0],
                               preferred_element_type=jnp.float32) + b1_ref[0], 0.0)
    x = x + (jnp.dot(hmid.astype(jnp.bfloat16), w2_ref[0],
                     preferred_element_type=jnp.float32) + b2_ref[0])

    x_sc[...] = x

    # ---------- fused head: final Norm + mu/log_var + sampling (last layer only) ----------
    @pl.when(n == pl.num_programs(1) - 1)
    def _():
        xh = _ln(x, na_ref[...], nb_ref[...], eps)
        y = (jnp.dot(xh.astype(jnp.bfloat16), wmv_ref[...],
                     preferred_element_type=jnp.float32) + bmv_ref[...])   # (rows, 2L)
        y = y.reshape(bt, s_pad, 2 * latent_dim)
        mu = y[:, :, :latent_dim]
        lv = y[:, :, latent_dim:]
        if variational:
            z = eps_ref[...] * jnp.exp(0.5 * lv) + mu
        else:
            z = mu
        # single lane slab [z | mu | log_var], split in the wrapper
        o_ref[...] = jnp.concatenate([z, mu, lv], axis=-1).astype(o_ref.dtype)


# ------------------------------ parameter init ------------------------------

def _w(key, shape, scale=0.02):
    return scale * jax.random.normal(key, shape, jnp.float32)


def init_params(key, vocab_size, d_model, N, h, dff, latent_dim, nconds, max_len=64):
    dk = d_model // h
    keys = jax.random.split(key, 4 + N)
    p = {}
    p["embed"] = _w(keys[0], (vocab_size, d_model), 1.0 / math.sqrt(d_model))
    p["cond_w"] = _w(keys[1], (nconds, d_model * nconds))
    p["cond_b"] = jnp.zeros((d_model * nconds,), jnp.float32)
    p["norm_a"] = jnp.ones((1, d_model), jnp.float32)
    p["norm_b"] = jnp.zeros((1, d_model), jnp.float32)
    mu_w = _w(keys[2], (d_model, latent_dim))
    lv_w = _w(keys[3], (d_model, latent_dim))
    # fused (mu | log_var) projection, bf16 matmul operand
    p["mulv_w"] = jnp.concatenate([mu_w, lv_w], axis=1).astype(jnp.bfloat16)
    p["mulv_b"] = jnp.zeros((1, 2 * latent_dim), jnp.float32)

    # sinusoidal positional encoding table (1, max_len, d_model)
    pos = jnp.arange(max_len, dtype=jnp.float32)[:, None]
    div = jnp.exp(jnp.arange(0, d_model, 2, dtype=jnp.float32)
                  * (-math.log(10000.0) / d_model))
    pe = jnp.zeros((max_len, d_model), jnp.float32)
    pe = pe.at[:, 0::2].set(jnp.sin(pos * div))
    pe = pe.at[:, 1::2].set(jnp.cos(pos * div))
    p["pe"] = pe[None]

    wq, wk, wv, wo, w1, w2 = [], [], [], [], [], []
    for i in range(N):
        lk = jax.random.split(keys[4 + i], 6)
        # fold the 1/sqrt(dk) attention scale into the Q projection (q bias is zero)
        wq.append(_w(lk[0], (d_model, d_model)) * (1.0 / math.sqrt(dk)))
        wk.append(_w(lk[1], (d_model, d_model)))
        wv.append(_w(lk[2], (d_model, d_model)))
        wo.append(_w(lk[3], (d_model, d_model)))
        w1.append(_w(lk[4], (d_model, dff)))
        w2.append(_w(lk[5], (dff, d_model)))

    # layer weights stacked along the layer axis; Q/K/V fused; bf16 matmul operands
    p["layers"] = {
        "n1_a": jnp.ones((N, 1, d_model), jnp.float32),
        "n1_b": jnp.zeros((N, 1, d_model), jnp.float32),
        "n2_a": jnp.ones((N, 1, d_model), jnp.float32),
        "n2_b": jnp.zeros((N, 1, d_model), jnp.float32),
        "wqkv": jnp.concatenate([jnp.stack(wq), jnp.stack(wk), jnp.stack(wv)],
                                axis=2).astype(jnp.bfloat16),
        "bqkv": jnp.zeros((N, 1, 3 * d_model), jnp.float32),
        "wo": jnp.stack(wo).astype(jnp.bfloat16),
        "bo": jnp.zeros((N, 1, d_model), jnp.float32),
        "w1": jnp.stack(w1).astype(jnp.bfloat16),
        "b1": jnp.zeros((N, 1, dff), jnp.float32),
        "w2": jnp.stack(w2).astype(jnp.bfloat16),
        "b2": jnp.zeros((N, 1, d_model), jnp.float32),
    }
    return p


# ------------------------------ batch-tile heuristic ------------------------------

def _pick_batch_tile(B, S_pad, target_rows=256):
    """Largest divisor Bt of B with Bt*S_pad <= target_rows, preferring
    >= 2 parallel grid blocks so both v7x TensorCores get work."""
    bt = 1
    for cand in range(1, B + 1):
        if B % cand == 0 and cand * S_pad <= target_rows:
            bt = cand
    if B // bt < 2:
        for cand in range(bt - 1, 0, -1):
            if B % cand == 0 and B // cand >= 2:
                bt = cand
                break
    return bt


# ------------------------------ encoder forward ------------------------------

@partial(jax.jit, static_argnames=("d_model", "N", "h", "variational"))
def encoder_forward(params, src, mask, econds, eps, *, d_model, N, h, variational=True):
    B = src.shape[0]
    nconds = econds.shape[1]
    dk = d_model // h
    latent_dim = eps.shape[-1]
    lp = params["layers"]
    dff = lp["b1"].shape[-1]

    # tiny glue (cond micro-matmul, token gather, concat) left to XLA fusion
    cond2enc = (econds @ params["cond_w"] + params["cond_b"]).reshape(B, nconds, d_model)
    emb = params["embed"][src] * math.sqrt(d_model)
    x = jnp.concatenate([cond2enc, emb], axis=1)                    # (B, S, D)
    S = x.shape[1]
    S_pad = ((S + 7) // 8) * 8                                      # sublane-friendly
    assert S_pad <= params["pe"].shape[1], "sequence longer than PE table"

    x_pad = jnp.pad(x, ((0, 0), (0, S_pad - S), (0, 0)))
    mask_f = mask.reshape(B, 1, -1).astype(jnp.float32)
    mask_pad = jnp.pad(mask_f, ((0, 0), (0, 0), (0, S_pad - S)))    # padded keys masked
    mask_add = jnp.where(mask_pad == 0.0, -1e9, 0.0).astype(jnp.float32)
    eps_pad = jnp.pad(eps, ((0, 0), (0, S_pad - S), (0, 0)))
    pe_pad = params["pe"][:, :S_pad, :]

    Bt = _pick_batch_tile(B, S_pad)
    D3 = 3 * d_model
    L2 = 2 * latent_dim
    L3 = 3 * latent_dim

    act_spec = pl.BlockSpec((Bt, S_pad, d_model), lambda b, n: (b, 0, 0))
    pe_spec = pl.BlockSpec((1, S_pad, d_model), lambda b, n: (0, 0, 0))
    m_spec = pl.BlockSpec((Bt, 1, S_pad), lambda b, n: (b, 0, 0))
    vecD = pl.BlockSpec((1, 1, d_model), lambda b, n: (n, 0, 0))
    vec3D = pl.BlockSpec((1, 1, D3), lambda b, n: (n, 0, 0))
    vecF = pl.BlockSpec((1, 1, dff), lambda b, n: (n, 0, 0))
    matQKV = pl.BlockSpec((1, d_model, D3), lambda b, n: (n, 0, 0))
    matO = pl.BlockSpec((1, d_model, d_model), lambda b, n: (n, 0, 0))
    mat1 = pl.BlockSpec((1, d_model, dff), lambda b, n: (n, 0, 0))
    mat2 = pl.BlockSpec((1, dff, d_model), lambda b, n: (n, 0, 0))
    normV = pl.BlockSpec((1, d_model), lambda b, n: (0, 0))
    headW = pl.BlockSpec((d_model, L2), lambda b, n: (0, 0))
    headB = pl.BlockSpec((1, L2), lambda b, n: (0, 0))
    eps_spec = pl.BlockSpec((Bt, S_pad, latent_dim), lambda b, n: (b, 0, 0))
    out_spec = pl.BlockSpec((Bt, S_pad, L3), lambda b, n: (b, 0, 0))

    # ---- ONE pallas_call: N-layer stack + final norm + mu/log_var + sampling ----
    out = pl.pallas_call(
        partial(_encoder_stack_kernel, bt=Bt, s_pad=S_pad, h=h, dk=dk,
                latent_dim=latent_dim, eps=LN_EPS, variational=variational),
        out_shape=jax.ShapeDtypeStruct((B, S_pad, L3), jnp.float32),
        grid=(B // Bt, N),
        in_specs=[act_spec, pe_spec, m_spec,
                  vecD, vecD, matQKV, vec3D, matO, vecD,
                  vecD, vecD, mat1, vecF, mat2, vecD,
                  normV, normV, headW, headB, eps_spec],
        out_specs=out_spec,
        scratch_shapes=[pltpu.VMEM((Bt * S_pad, d_model), jnp.float32)],  # activation carry
        compiler_params=pltpu.CompilerParams(
            dimension_semantics=("parallel", "arbitrary"),
            vmem_limit_bytes=48 * 1024 * 1024),
    )(x_pad, pe_pad, mask_add,
      lp["n1_a"], lp["n1_b"], lp["wqkv"], lp["bqkv"], lp["wo"], lp["bo"],
      lp["n2_a"], lp["n2_b"], lp["w1"], lp["b1"], lp["w2"], lp["b2"],
      params["norm_a"], params["norm_b"], params["mulv_w"], params["mulv_b"],
      eps_pad)

    # split the [z | mu | log_var] slab and drop the sequence padding
    z = out[:, :S, :latent_dim]
    mu = out[:, :S, latent_dim:2 * latent_dim]
    log_var = out[:, :S, 2 * latent_dim:]
    return z, mu, log_var


# ----------------------------------- main ------------------------------------

if __name__ == "__main__":
    vocab_size, d_model, N, h, dff, latent_dim, nconds = 20, 32, 2, 4, 64, 16, 3
    B, src_len = 2, 8
    S = nconds + src_len                                   # sequence after cond concat

    key = jax.random.PRNGKey(0)
    kp, ks, kc, ke = jax.random.split(key, 4)

    params = init_params(kp, vocab_size, d_model, N, h, dff, latent_dim, nconds)

    src = jax.random.randint(ks, (B, src_len), 0, vocab_size)           # token ids
    econds = jax.random.normal(kc, (B, nconds), jnp.float32)            # conditions
    # mask over the concatenated sequence (last 2 positions padded out)
    mask = jnp.tile((jnp.arange(S) < S - 2).astype(jnp.float32)[None, None, :], (B, 1, 1))
    eps = jax.random.normal(ke, (B, S, latent_dim), jnp.float32)        # reparam noise

    z, mu, log_var = encoder_forward(
        params, src, mask, econds, eps, d_model=d_model, N=N, h=h, variational=True)

    jax.block_until_ready((z, mu, log_var))
    assert z.shape == (B, S, latent_dim) and mu.shape == z.shape and log_var.shape == z.shape
    assert bool(jnp.all(jnp.isfinite(z))) and bool(jnp.all(jnp.isfinite(mu)))
    assert bool(jnp.all(jnp.isfinite(log_var)))
    print("KERNEL_OK")
</pallas_src>

<mosaic_0001>
module attributes {stable_mosaic.version = 11 : i64} {
  func.func @_encoder_stack_kernel(%arg0: i32, %arg1: i32, %arg2: memref<1x16x32xf32, #tpu.memory_space<vmem>>, %arg3: memref<1x16x32xf32, #tpu.memory_space<vmem>>, %arg4: memref<1x1x16xf32, #tpu.memory_space<vmem>>, %arg5: memref<1x1x32xf32, #tpu.memory_space<vmem>>, %arg6: memref<1x1x32xf32, #tpu.memory_space<vmem>>, %arg7: memref<1x32x96xbf16, #tpu.memory_space<vmem>>, %arg8: memref<1x1x96xf32, #tpu.memory_space<vmem>>, %arg9: memref<1x32x32xbf16, #tpu.memory_space<vmem>>, %arg10: memref<1x1x32xf32, #tpu.memory_space<vmem>>, %arg11: memref<1x1x32xf32, #tpu.memory_space<vmem>>, %arg12: memref<1x1x32xf32, #tpu.memory_space<vmem>>, %arg13: memref<1x32x64xbf16, #tpu.memory_space<vmem>>, %arg14: memref<1x1x64xf32, #tpu.memory_space<vmem>>, %arg15: memref<1x64x32xbf16, #tpu.memory_space<vmem>>, %arg16: memref<1x1x32xf32, #tpu.memory_space<vmem>>, %arg17: memref<1x32xf32, #tpu.memory_space<vmem>>, %arg18: memref<1x32xf32, #tpu.memory_space<vmem>>, %arg19: memref<32x32xbf16, #tpu.memory_space<vmem>>, %arg20: memref<1x32xf32, #tpu.memory_space<vmem>>, %arg21: memref<1x16x16xf32, #tpu.memory_space<vmem>>, %arg22: memref<1x16x48xf32, #tpu.memory_space<vmem>>, %arg23: memref<16x32xf32, #tpu.memory_space<vmem>>) attributes {dimension_semantics = [#tpu.dimension_semantics<parallel>, #tpu.dimension_semantics<arbitrary>], iteration_bounds = array<i64: 2, 2>, scalar_prefetch = 0 : i64, scratch_operands = 1 : i64, tpu.core_type = #tpu.core_type<tc>, window_params = [{transform_indices = @transform_0, window_bounds = array<i64: 1, 16, 32>}, {pipeline_mode = #tpu.pipeline_mode<synchronous>, transform_indices = @transform_1, window_bounds = array<i64: 1, 16, 32>}, {transform_indices = @transform_2, window_bounds = array<i64: 1, 1, 16>}, {transform_indices = @transform_3, window_bounds = array<i64: 1, 1, 32>}, {transform_indices = @transform_4, window_bounds = array<i64: 1, 1, 32>}, {transform_indices = @transform_5, window_bounds = array<i64: 1, 32, 96>}, {transform_indices = @transform_6, window_bounds = array<i64: 1, 1, 96>}, {transform_indices = @transform_7, window_bounds = array<i64: 1, 32, 32>}, {transform_indices = @transform_8, window_bounds = array<i64: 1, 1, 32>}, {transform_indices = @transform_9, window_bounds = array<i64: 1, 1, 32>}, {transform_indices = @transform_10, window_bounds = array<i64: 1, 1, 32>}, {transform_indices = @transform_11, window_bounds = array<i64: 1, 32, 64>}, {transform_indices = @transform_12, window_bounds = array<i64: 1, 1, 64>}, {transform_indices = @transform_13, window_bounds = array<i64: 1, 64, 32>}, {transform_indices = @transform_14, window_bounds = array<i64: 1, 1, 32>}, {pipeline_mode = #tpu.pipeline_mode<synchronous>, transform_indices = @transform_15, window_bounds = array<i64: 1, 32>}, {pipeline_mode = #tpu.pipeline_mode<synchronous>, transform_indices = @transform_16, window_bounds = array<i64: 1, 32>}, {pipeline_mode = #tpu.pipeline_mode<synchronous>, transform_indices = @transform_17, window_bounds = array<i64: 32, 32>}, {pipeline_mode = #tpu.pipeline_mode<synchronous>, transform_indices = @transform_18, window_bounds = array<i64: 1, 32>}, {transform_indices = @transform_19, window_bounds = array<i64: 1, 16, 16>}, {transform_indices = @transform_20, window_bounds = array<i64: 1, 16, 48>}]} {
    %c0_i32 = arith.constant 0 : i32
    %0 = arith.cmpi eq, %arg1, %c0_i32 : i32
    %1 = arith.extui %0 : i1 to i32
    %c0_i32_0 = arith.constant 0 : i32
    %2 = arith.cmpi ne, %1, %c0_i32_0 : i32
    scf.if %2 {
      %c0_74 = arith.constant 0 : index
      %c0_75 = arith.constant 0 : index
      %c0_76 = arith.constant 0 : index
      %182 = vector.load %arg2[%c0_74, %c0_75, %c0_76] : memref<1x16x32xf32, #tpu.memory_space<vmem>>, vector<1x16x32xf32>
      %c0_77 = arith.constant 0 : index
      %c0_78 = arith.constant 0 : index
      %c0_79 = arith.constant 0 : index
      %183 = vector.load %arg3[%c0_77, %c0_78, %c0_79] : memref<1x16x32xf32, #tpu.memory_space<vmem>>, vector<1x16x32xf32>
      %184 = arith.addf %182, %183 : vector<1x16x32xf32>
      %185 = vector.shape_cast %184 : vector<1x16x32xf32> to vector<16x32xf32>
      %c0_80 = arith.constant 0 : index
      %c0_81 = arith.constant 0 : index
      %186 = vector.load %arg23[%c0_80, %c0_81] : memref<16x32xf32, #tpu.memory_space<vmem>>, vector<16x32xf32>
      tpu.vector_store %arg23[%c0_80, %c0_81], %185 {strides = array<i32>} : memref<16x32xf32, #tpu.memory_space<vmem>>, vector<16x32xf32>,
    } else {
    }
    %c0 = arith.constant 0 : index
    %c0_1 = arith.constant 0 : index
    %3 = vector.load %arg23[%c0, %c0_1] : memref<16x32xf32, #tpu.memory_space<vmem>>, vector<16x32xf32>
    %c0_2 = arith.constant 0 : index
    %c0_3 = arith.constant 0 : index
    %c0_4 = arith.constant 0 : index
    %4 = vector.load %arg4[%c0_2, %c0_3, %c0_4] : memref<1x1x16xf32, #tpu.memory_space<vmem>>, vector<1x1x16xf32>
    %c0_5 = arith.constant 0 : index
    %c0_6 = arith.constant 0 : index
    %c0_7 = arith.constant 0 : index
    %5 = vector.load %arg5[%c0_5, %c0_6, %c0_7] : memref<1x1x32xf32, #tpu.memory_space<vmem>>, vector<1x1x32xf32>
    %6 = vector.shape_cast %5 : vector<1x1x32xf32> to vector<1x32xf32>
    %c0_8 = arith.constant 0 : index
    %c0_9 = arith.constant 0 : index
    %c0_10 = arith.constant 0 : index
    %7 = vector.load %arg6[%c0_8, %c0_9, %c0_10] : memref<1x1x32xf32, #tpu.memory_space<vmem>>, vector<1x1x32xf32>
    %8 = vector.shape_cast %7 : vector<1x1x32xf32> to vector<1x32xf32>
    %cst = arith.constant dense<0.000000e+00> : vector<16xf32>
    %9 = vector.multi_reduction <add>, %3, %cst [1] : vector<16x32xf32> to vector<16xf32>
    %10 = vector.shape_cast %9 : vector<16xf32> to vector<16x1xf32>
    %cst_11 = arith.constant 3.200000e+01 : f32
    %11 = vector.broadcast %cst_11 : f32 to vector<16x1xf32>
    %12 = arith.divf %10, %11 : vector<16x1xf32>
    %13 = vector.broadcast %12 : vector<16x1xf32> to vector<16x32xf32>
    %14 = arith.subf %3, %13 : vector<16x32xf32>
    %15 = arith.mulf %14, %14 : vector<16x32xf32>
    %cst_12 = arith.constant dense<0.000000e+00> : vector<16xf32>
    %16 = vector.multi_reduction <add>, %15, %cst_12 [1] : vector<16x32xf32> to vector<16xf32>
    %17 = vector.shape_cast %16 : vector<16xf32> to vector<16x1xf32>
    %cst_13 = arith.constant 0.0322580636 : f32
    %18 = vector.broadcast %cst_13 : f32 to vector<16x1xf32>
    %19 = arith.mulf %17, %18 : vector<16x1xf32>
    %20 = math.sqrt %19 : vector<16x1xf32>
    %cst_14 = arith.constant 9.99999997E-7 : f32
    %21 = vector.broadcast %cst_14 : f32 to vector<16x1xf32>
    %22 = arith.addf %20, %21 : vector<16x1xf32>
    %23 = tpu.reciprocal %22 {approx = true} : vector<16x1xf32> -> vector<16x1xf32>
    %24 = vector.broadcast %23 : vector<16x1xf32> to vector<16x32xf32>
    %25 = arith.mulf %14, %24 : vector<16x32xf32>
    %26 = vector.broadcast %6 : vector<1x32xf32> to vector<16x32xf32>
    %27 = arith.mulf %26, %25 : vector<16x32xf32>
    %28 = vector.broadcast %8 : vector<1x32xf32> to vector<16x32xf32>
    %29 = arith.addf %27, %28 : vector<16x32xf32>
    %30 = arith.truncf %29 : vector<16x32xf32> to vector<16x32xbf16>
    %c0_15 = arith.constant 0 : index
    %c0_16 = arith.constant 0 : index
    %c0_17 = arith.constant 0 : index
    %31 = vector.load %arg7[%c0_15, %c0_16, %c0_17] : memref<1x32x96xbf16, #tpu.memory_space<vmem>>, vector<1x32x96xbf16>
    %32 = vector.shape_cast %31 : vector<1x32x96xbf16> to vector<32x96xbf16>
    %cst_18 = arith.constant dense<0.000000e+00> : vector<16x96xf32>
    %33 = tpu.matmul %30, %32, %cst_18 {dimension_numbers = #tpu.dot_dimension_numbers<[1], [0], [0], [1], [0, 0, 1, 1], [], []>} : vector<16x32xbf16>, vector<32x96xbf16>, vector<16x96xf32> -> vector<16x96xf32>
    %c0_19 = arith.constant 0 : index
    %c0_20 = arith.constant 0 : index
    %c0_21 = arith.constant 0 : index
    %34 = vector.load %arg8[%c0_19, %c0_20, %c0_21] : memref<1x1x96xf32, #tpu.memory_space<vmem>>, vector<1x1x96xf32>
    %35 = vector.shape_cast %34 : vector<1x1x96xf32> to vector<1x96xf32>
    %36 = vector.broadcast %35 : vector<1x96xf32> to vector<16x96xf32>
    %37 = arith.addf %33, %36 : vector<16x96xf32>
    %38 = vector.shape_cast %37 : vector<16x96xf32> to vector<1x16x96xf32>
    %39 = vector.extract_strided_slice %38 {offsets = [0, 0, 0], sizes = [1, 16, 8], strides = [1, 1, 1]} : vector<1x16x96xf32> to vector<1x16x8xf32>
    %40 = arith.truncf %39 : vector<1x16x8xf32> to vector<1x16x8xbf16>
    %41 = vector.extract_strided_slice %38 {offsets = [0, 0, 32], sizes = [1, 16, 8], strides = [1, 1, 1]} : vector<1x16x96xf32> to vector<1x16x8xf32>
    %42 = arith.truncf %41 : vector<1x16x8xf32> to vector<1x16x8xbf16>
    %43 = vector.extract_strided_slice %38 {offsets = [0, 0, 64], sizes = [1, 16, 8], strides = [1, 1, 1]} : vector<1x16x96xf32> to vector<1x16x8xf32>
    %44 = arith.truncf %43 : vector<1x16x8xf32> to vector<1x16x8xbf16>
    %cst_22 = arith.constant dense<0.000000e+00> : vector<1x16x16xf32>
    %45 = tpu.matmul %40, %42, %cst_22 {dimension_numbers = #tpu.dot_dimension_numbers<[2], [2], [1], [1], [0, 0, 0, 1, 1, 1], [0], [0]>} : vector<1x16x8xbf16>, vector<1x16x8xbf16>, vector<1x16x16xf32> -> vector<1x16x16xf32>
    %46 = vector.broadcast %4 : vector<1x1x16xf32> to vector<1x16x16xf32>
    %47 = arith.addf %45, %46 : vector<1x16x16xf32>
    %cst_23 = arith.constant dense<0xFF800000> : vector<1x16xf32>
    %48 = vector.multi_reduction <maximumf>, %47, %cst_23 [2] : vector<1x16x16xf32> to vector<1x16xf32>
    %49 = vector.shape_cast %48 : vector<1x16xf32> to vector<1x16x1xf32>
    %50 = vector.broadcast %49 : vector<1x16x1xf32> to vector<1x16x16xf32>
    %51 = arith.subf %47, %50 : vector<1x16x16xf32>
    %52 = math.exp %51 : vector<1x16x16xf32>
    %cst_24 = arith.constant dense<0.000000e+00> : vector<1x16xf32>
    %53 = vector.multi_reduction <add>, %52, %cst_24 [2] : vector<1x16x16xf32> to vector<1x16xf32>
    %54 = vector.shape_cast %53 : vector<1x16xf32> to vector<1x16x1xf32>
    %55 = tpu.reciprocal %54 {approx = true} : vector<1x16x1xf32> -> vector<1x16x1xf32>
    %56 = vector.broadcast %55 : vector<1x16x1xf32> to vector<1x16x16xf32>
    %57 = arith.mulf %52, %56 : vector<1x16x16xf32>
    %58 = arith.truncf %57 : vector<1x16x16xf32> to vector<1x16x16xbf16>
    %cst_25 = arith.constant dense<0.000000e+00> : vector<1x16x8xf32>
    %59 = tpu.matmul %58, %44, %cst_25 {dimension_numbers = #tpu.dot_dimension_numbers<[2], [1], [1], [2], [0, 0, 0, 1, 1, 2], [0], [0]>} : vector<1x16x16xbf16>, vector<1x16x8xbf16>, vector<1x16x8xf32> -> vector<1x16x8xf32>
    %60 = vector.extract_strided_slice %38 {offsets = [0, 0, 8], sizes = [1, 16, 8], strides = [1, 1, 1]} : vector<1x16x96xf32> to vector<1x16x8xf32>
    %61 = arith.truncf %60 : vector<1x16x8xf32> to vector<1x16x8xbf16>
    %62 = vector.extract_strided_slice %38 {offsets = [0, 0, 40], sizes = [1, 16, 8], strides = [1, 1, 1]} : vector<1x16x96xf32> to vector<1x16x8xf32>
    %63 = arith.truncf %62 : vector<1x16x8xf32> to vector<1x16x8xbf16>
    %64 = vector.extract_strided_slice %38 {offsets = [0, 0, 72], sizes = [1, 16, 8], strides = [1, 1, 1]} : vector<1x16x96xf32> to vector<1x16x8xf32>
    %65 = arith.truncf %64 : vector<1x16x8xf32> to vector<1x16x8xbf16>
    %cst_26 = arith.constant dense<0.000000e+00> : vector<1x16x16xf32>
    %66 = tpu.matmul %61, %63, %cst_26 {dimension_numbers = #tpu.dot_dimension_numbers<[2], [2], [1], [1], [0, 0, 0, 1, 1, 1], [0], [0]>} : vector<1x16x8xbf16>, vector<1x16x8xbf16>, vector<1x16x16xf32> -> vector<1x16x16xf32>
    %67 = vector.broadcast %4 : vector<1x1x16xf32> to vector<1x16x16xf32>
    %68 = arith.addf %66, %67 : vector<1x16x16xf32>
    %cst_27 = arith.constant dense<0xFF800000> : vector<1x16xf32>
    %69 = vector.multi_reduction <maximumf>, %68, %cst_27 [2] : vector<1x16x16xf32> to vector<1x16xf32>
    %70 = vector.shape_cast %69 : vector<1x16xf32> to vector<1x16x1xf32>
    %71 = vector.broadcast %70 : vector<1x16x1xf32> to vector<1x16x16xf32>
    %72 = arith.subf %68, %71 : vector<1x16x16xf32>
    %73 = math.exp %72 : vector<1x16x16xf32>
    %cst_28 = arith.constant dense<0.000000e+00> : vector<1x16xf32>
    %74 = vector.multi_reduction <add>, %73, %cst_28 [2] : vector<1x16x16xf32> to vector<1x16xf32>
    %75 = vector.shape_cast %74 : vector<1x16xf32> to vector<1x16x1xf32>
    %76 = tpu.reciprocal %75 {approx = true} : vector<1x16x1xf32> -> vector<1x16x1xf32>
    %77 = vector.broadcast %76 : vector<1x16x1xf32> to vector<1x16x16xf32>
    %78 = arith.mulf %73, %77 : vector<1x16x16xf32>
    %79 = arith.truncf %78 : vector<1x16x16xf32> to vector<1x16x16xbf16>
    %cst_29 = arith.constant dense<0.000000e+00> : vector<1x16x8xf32>
    %80 = tpu.matmul %79, %65, %cst_29 {dimension_numbers = #tpu.dot_dimension_numbers<[2], [1], [1], [2], [0, 0, 0, 1, 1, 2], [0], [0]>} : vector<1x16x16xbf16>, vector<1x16x8xbf16>, vector<1x16x8xf32> -> vector<1x16x8xf32>
    %81 = vector.extract_strided_slice %38 {offsets = [0, 0, 16], sizes = [1, 16, 8], strides = [1, 1, 1]} : vector<1x16x96xf32> to vector<1x16x8xf32>
    %82 = arith.truncf %81 : vector<1x16x8xf32> to vector<1x16x8xbf16>
    %83 = vector.extract_strided_slice %38 {offsets = [0, 0, 48], sizes = [1, 16, 8], strides = [1, 1, 1]} : vector<1x16x96xf32> to vector<1x16x8xf32>
    %84 = arith.truncf %83 : vector<1x16x8xf32> to vector<1x16x8xbf16>
    %85 = vector.extract_strided_slice %38 {offsets = [0, 0, 80], sizes = [1, 16, 8], strides = [1, 1, 1]} : vector<1x16x96xf32> to vector<1x16x8xf32>
    %86 = arith.truncf %85 : vector<1x16x8xf32> to vector<1x16x8xbf16>
    %cst_30 = arith.constant dense<0.000000e+00> : vector<1x16x16xf32>
    %87 = tpu.matmul %82, %84, %cst_30 {dimension_numbers = #tpu.dot_dimension_numbers<[2], [2], [1], [1], [0, 0, 0, 1, 1, 1], [0], [0]>} : vector<1x16x8xbf16>, vector<1x16x8xbf16>, vector<1x16x16xf32> -> vector<1x16x16xf32>
    %88 = vector.broadcast %4 : vector<1x1x16xf32> to vector<1x16x16xf32>
    %89 = arith.addf %87, %88 : vector<1x16x16xf32>
    %cst_31 = arith.constant dense<0xFF800000> : vector<1x16xf32>
    %90 = vector.multi_reduction <maximumf>, %89, %cst_31 [2] : vector<1x16x16xf32> to vector<1x16xf32>
    %91 = vector.shape_cast %90 : vector<1x16xf32> to vector<1x16x1xf32>
    %92 = vector.broadcast %91 : vector<1x16x1xf32> to vector<1x16x16xf32>
    %93 = arith.subf %89, %92 : vector<1x16x16xf32>
    %94 = math.exp %93 : vector<1x16x16xf32>
    %cst_32 = arith.constant dense<0.000000e+00> : vector<1x16xf32>
    %95 = vector.multi_reduction <add>, %94, %cst_32 [2] : vector<1x16x16xf32> to vector<1x16xf32>
    %96 = vector.shape_cast %95 : vector<1x16xf32> to vector<1x16x1xf32>
    %97 = tpu.reciprocal %96 {approx = true} : vector<1x16x1xf32> -> vector<1x16x1xf32>
    %98 = vector.broadcast %97 : vector<1x16x1xf32> to vector<1x16x16xf32>
    %99 = arith.mulf %94, %98 : vector<1x16x16xf32>
    %100 = arith.truncf %99 : vector<1x16x16xf32> to vector<1x16x16xbf16>
    %cst_33 = arith.constant dense<0.000000e+00> : vector<1x16x8xf32>
    %101 = tpu.matmul %100, %86, %cst_33 {dimension_numbers = #tpu.dot_dimension_numbers<[2], [1], [1], [2], [0, 0, 0, 1, 1, 2], [0], [0]>} : vector<1x16x16xbf16>, vector<1x16x8xbf16>, vector<1x16x8xf32> -> vector<1x16x8xf32>
    %102 = vector.extract_strided_slice %38 {offsets = [0, 0, 24], sizes = [1, 16, 8], strides = [1, 1, 1]} : vector<1x16x96xf32> to vector<1x16x8xf32>
    %103 = arith.truncf %102 : vector<1x16x8xf32> to vector<1x16x8xbf16>
    %104 = vector.extract_strided_slice %38 {offsets = [0, 0, 56], sizes = [1, 16, 8], strides = [1, 1, 1]} : vector<1x16x96xf32> to vector<1x16x8xf32>
    %105 = arith.truncf %104 : vector<1x16x8xf32> to vector<1x16x8xbf16>
    %106 = vector.extract_strided_slice %38 {offsets = [0, 0, 88], sizes = [1, 16, 8], strides = [1, 1, 1]} : vector<1x16x96xf32> to vector<1x16x8xf32>
    %107 = arith.truncf %106 : vector<1x16x8xf32> to vector<1x16x8xbf16>
    %cst_34 = arith.constant dense<0.000000e+00> : vector<1x16x16xf32>
    %108 = tpu.matmul %103, %105, %cst_34 {dimension_numbers = #tpu.dot_dimension_numbers<[2], [2], [1], [1], [0, 0, 0, 1, 1, 1], [0], [0]>} : vector<1x16x8xbf16>, vector<1x16x8xbf16>, vector<1x16x16xf32> -> vector<1x16x16xf32>
    %109 = vector.broadcast %4 : vector<1x1x16xf32> to vector<1x16x16xf32>
    %110 = arith.addf %108, %109 : vector<1x16x16xf32>
    %cst_35 = arith.constant dense<0xFF800000> : vector<1x16xf32>
    %111 = vector.multi_reduction <maximumf>, %110, %cst_35 [2] : vector<1x16x16xf32> to vector<1x16xf32>
    %112 = vector.shape_cast %111 : vector<1x16xf32> to vector<1x16x1xf32>
    %113 = vector.broadcast %112 : vector<1x16x1xf32> to vector<1x16x16xf32>
    %114 = arith.subf %110, %113 : vector<1x16x16xf32>
    %115 = math.exp %114 : vector<1x16x16xf32>
    %cst_36 = arith.constant dense<0.000000e+00> : vector<1x16xf32>
    %116 = vector.multi_reduction <add>, %115, %cst_36 [2] : vector<1x16x16xf32> to vector<1x16xf32>
    %117 = vector.shape_cast %116 : vector<1x16xf32> to vector<1x16x1xf32>
    %118 = tpu.reciprocal %117 {approx = true} : vector<1x16x1xf32> -> vector<1x16x1xf32>
    %119 = vector.broadcast %118 : vector<1x16x1xf32> to vector<1x16x16xf32>
    %120 = arith.mulf %115, %119 : vector<1x16x16xf32>
    %121 = arith.truncf %120 : vector<1x16x16xf32> to vector<1x16x16xbf16>
    %cst_37 = arith.constant dense<0.000000e+00> : vector<1x16x8xf32>
    %122 = tpu.matmul %121, %107, %cst_37 {dimension_numbers = #tpu.dot_dimension_numbers<[2], [1], [1], [2], [0, 0, 0, 1, 1, 2], [0], [0]>} : vector<1x16x16xbf16>, vector<1x16x8xbf16>, vector<1x16x8xf32> -> vector<1x16x8xf32>
    %123 = tpu.concatenate %59, %80, %101, %122 in 2 : vector<1x16x8xf32>, vector<1x16x8xf32>, vector<1x16x8xf32>, vector<1x16x8xf32> -> vector<1x16x32xf32>
    %124 = vector.shape_cast %123 : vector<1x16x32xf32> to vector<16x32xf32>
    %125 = arith.truncf %124 : vector<16x32xf32> to vector<16x32xbf16>
    %c0_38 = arith.constant 0 : index
    %c0_39 = arith.constant 0 : index
    %c0_40 = arith.constant 0 : index
    %126 = vector.load %arg9[%c0_38, %c0_39, %c0_40] : memref<1x32x32xbf16, #tpu.memory_space<vmem>>, vector<1x32x32xbf16>
    %127 = vector.shape_cast %126 : vector<1x32x32xbf16> to vector<32x32xbf16>
    %cst_41 = arith.constant dense<0.000000e+00> : vector<16x32xf32>
    %128 = tpu.matmul %125, %127, %cst_41 {dimension_numbers = #tpu.dot_dimension_numbers<[1], [0], [0], [1], [0, 0, 1, 1], [], []>} : vector<16x32xbf16>, vector<32x32xbf16>, vector<16x32xf32> -> vector<16x32xf32>
    %c0_42 = arith.constant 0 : index
    %c0_43 = arith.constant 0 : index
    %c0_44 = arith.constant 0 : index
    %129 = vector.load %arg10[%c0_42, %c0_43, %c0_44] : memref<1x1x32xf32, #tpu.memory_space<vmem>>, vector<1x1x32xf32>
    %130 = vector.shape_cast %129 : vector<1x1x32xf32> to vector<1x32xf32>
    %131 = vector.broadcast %130 : vector<1x32xf32> to vector<16x32xf32>
    %132 = arith.addf %128, %131 : vector<16x32xf32>
    %133 = arith.addf %3, %132 : vector<16x32xf32>
    %c0_45 = arith.constant 0 : index
    %c0_46 = arith.constant 0 : index
    %c0_47 = arith.constant 0 : index
    %134 = vector.load %arg11[%c0_45, %c0_46, %c0_47] : memref<1x1x32xf32, #tpu.memory_space<vmem>>, vector<1x1x32xf32>
    %135 = vector.shape_cast %134 : vector<1x1x32xf32> to vector<1x32xf32>
    %c0_48 = arith.constant 0 : index
    %c0_49 = arith.constant 0 : index
    %c0_50 = arith.constant 0 : index
    %136 = vector.load %arg12[%c0_48, %c0_49, %c0_50] : memref<1x1x32xf32, #tpu.memory_space<vmem>>, vector<1x1x32xf32>
    %137 = vector.shape_cast %136 : vector<1x1x32xf32> to vector<1x32xf32>
    %cst_51 = arith.constant dense<0.000000e+00> : vector<16xf32>
    %138 = vector.multi_reduction <add>, %133, %cst_51 [1] : vector<16x32xf32> to vector<16xf32>
    %139 = vector.shape_cast %138 : vector<16xf32> to vector<16x1xf32>
    %cst_52 = arith.constant 3.200000e+01 : f32
    %140 = vector.broadcast %cst_52 : f32 to vector<16x1xf32>
    %141 = arith.divf %139, %140 : vector<16x1xf32>
    %142 = vector.broadcast %141 : vector<16x1xf32> to vector<16x32xf32>
    %143 = arith.subf %133, %142 : vector<16x32xf32>
    %144 = arith.mulf %143, %143 : vector<16x32xf32>
    %cst_53 = arith.constant dense<0.000000e+00> : vector<16xf32>
    %145 = vector.multi_reduction <add>, %144, %cst_53 [1] : vector<16x32xf32> to vector<16xf32>
    %146 = vector.shape_cast %145 : vector<16xf32> to vector<16x1xf32>
    %cst_54 = arith.constant 0.0322580636 : f32
    %147 = vector.broadcast %cst_54 : f32 to vector<16x1xf32>
    %148 = arith.mulf %146, %147 : vector<16x1xf32>
    %149 = math.sqrt %148 : vector<16x1xf32>
    %cst_55 = arith.constant 9.99999997E-7 : f32
    %150 = vector.broadcast %cst_55 : f32 to vector<16x1xf32>
    %151 = arith.addf %149, %150 : vector<16x1xf32>
    %152 = tpu.reciprocal %151 {approx = true} : vector<16x1xf32> -> vector<16x1xf32>
    %153 = vector.broadcast %152 : vector<16x1xf32> to vector<16x32xf32>
    %154 = arith.mulf %143, %153 : vector<16x32xf32>
    %155 = vector.broadcast %135 : vector<1x32xf32> to vector<16x32xf32>
    %156 = arith.mulf %155, %154 : vector<16x32xf32>
    %157 = vector.broadcast %137 : vector<1x32xf32> to vector<16x32xf32>
    %158 = arith.addf %156, %157 : vector<16x32xf32>
    %159 = arith.truncf %158 : vector<16x32xf32> to vector<16x32xbf16>
    %c0_56 = arith.constant 0 : index
    %c0_57 = arith.constant 0 : index
    %c0_58 = arith.constant 0 : index
    %160 = vector.load %arg13[%c0_56, %c0_57, %c0_58] : memref<1x32x64xbf16, #tpu.memory_space<vmem>>, vector<1x32x64xbf16>
    %161 = vector.shape_cast %160 : vector<1x32x64xbf16> to vector<32x64xbf16>
    %cst_59 = arith.constant dense<0.000000e+00> : vector<16x64xf32>
    %162 = tpu.matmul %159, %161, %cst_59 {dimension_numbers = #tpu.dot_dimension_numbers<[1], [0], [0], [1], [0, 0, 1, 1], [], []>} : vector<16x32xbf16>, vector<32x64xbf16>, vector<16x64xf32> -> vector<16x64xf32>
    %c0_60 = arith.constant 0 : index
    %c0_61 = arith.constant 0 : index
    %c0_62 = arith.constant 0 : index
    %163 = vector.load %arg14[%c0_60, %c0_61, %c0_62] : memref<1x1x64xf32, #tpu.memory_space<vmem>>, vector<1x1x64xf32>
    %164 = vector.shape_cast %163 : vector<1x1x64xf32> to vector<1x64xf32>
    %165 = vector.broadcast %164 : vector<1x64xf32> to vector<16x64xf32>
    %166 = arith.addf %162, %165 : vector<16x64xf32>
    %cst_63 = arith.constant 0.000000e+00 : f32
    %167 = vector.broadcast %cst_63 : f32 to vector<16x64xf32>
    %168 = arith.maximumf %166, %167 : vector<16x64xf32>
    %169 = arith.truncf %168 : vector<16x64xf32> to vector<16x64xbf16>
    %c0_64 = arith.constant 0 : index
    %c0_65 = arith.constant 0 : index
    %c0_66 = arith.constant 0 : index
    %170 = vector.load %arg15[%c0_64, %c0_65, %c0_66] : memref<1x64x32xbf16, #tpu.memory_space<vmem>>, vector<1x64x32xbf16>
    %171 = vector.shape_cast %170 : vector<1x64x32xbf16> to vector<64x32xbf16>
    %cst_67 = arith.constant dense<0.000000e+00> : vector<16x32xf32>
    %172 = tpu.matmul %169, %171, %cst_67 {dimension_numbers = #tpu.dot_dimension_numbers<[1], [0], [0], [1], [0, 0, 1, 1], [], []>} : vector<16x64xbf16>, vector<64x32xbf16>, vector<16x32xf32> -> vector<16x32xf32>
    %c0_68 = arith.constant 0 : index
    %c0_69 = arith.constant 0 : index
    %c0_70 = arith.constant 0 : index
    %173 = vector.load %arg16[%c0_68, %c0_69, %c0_70] : memref<1x1x32xf32, #tpu.memory_space<vmem>>, vector<1x1x32xf32>
    %174 = vector.shape_cast %173 : vector<1x1x32xf32> to vector<1x32xf32>
    %175 = vector.broadcast %174 : vector<1x32xf32> to vector<16x32xf32>
    %176 = arith.addf %172, %175 : vector<16x32xf32>
    %177 = arith.addf %133, %176 : vector<16x32xf32>
    %c0_71 = arith.constant 0 : index
    %c0_72 = arith.constant 0 : index
    %178 = vector.load %arg23[%c0_71, %c0_72] : memref<16x32xf32, #tpu.memory_space<vmem>>, vector<16x32xf32>
    tpu.vector_store %arg23[%c0_71, %c0_72], %177 {strides = array<i32>} : memref<16x32xf32, #tpu.memory_space<vmem>>, vector<16x32xf32>,
    %c1_i32 = arith.constant 1 : i32
    %179 = arith.cmpi eq, %arg1, %c1_i32 : i32
    %180 = arith.extui %179 : i1 to i32
    %c0_i32_73 = arith.constant 0 : i32
    %181 = arith.cmpi ne, %180, %c0_i32_73 : i32
    scf.if %181 {
      %c0_74 = arith.constant 0 : index
      %c0_75 = arith.constant 0 : index
      %182 = vector.load %arg17[%c0_74, %c0_75] : memref<1x32xf32, #tpu.memory_space<vmem>>, vector<1x32xf32>
      %c0_76 = arith.constant 0 : index
      %c0_77 = arith.constant 0 : index
      %183 = vector.load %arg18[%c0_76, %c0_77] : memref<1x32xf32, #tpu.memory_space<vmem>>, vector<1x32xf32>
      %cst_78 = arith.constant dense<0.000000e+00> : vector<16xf32>
      %184 = vector.multi_reduction <add>, %177, %cst_78 [1] : vector<16x32xf32> to vector<16xf32>
      %185 = vector.shape_cast %184 : vector<16xf32> to vector<16x1xf32>
      %cst_79 = arith.constant 3.200000e+01 : f32
      %186 = vector.broadcast %cst_79 : f32 to vector<16x1xf32>
      %187 = arith.divf %185, %186 : vector<16x1xf32>
      %188 = vector.broadcast %187 : vector<16x1xf32> to vector<16x32xf32>
      %189 = arith.subf %177, %188 : vector<16x32xf32>
      %190 = arith.mulf %189, %189 : vector<16x32xf32>
      %cst_80 = arith.constant dense<0.000000e+00> : vector<16xf32>
      %191 = vector.multi_reduction <add>, %190, %cst_80 [1] : vector<16x32xf32> to vector<16xf32>
      %192 = vector.shape_cast %191 : vector<16xf32> to vector<16x1xf32>
      %cst_81 = arith.constant 0.0322580636 : f32
      %193 = vector.broadcast %cst_81 : f32 to vector<16x1xf32>
      %194 = arith.mulf %192, %193 : vector<16x1xf32>
      %195 = math.sqrt %194 : vector<16x1xf32>
      %cst_82 = arith.constant 9.99999997E-7 : f32
      %196 = vector.broadcast %cst_82 : f32 to vector<16x1xf32>
      %197 = arith.addf %195, %196 : vector<16x1xf32>
      %198 = tpu.reciprocal %197 {approx = true} : vector<16x1xf32> -> vector<16x1xf32>
      %199 = vector.broadcast %198 : vector<16x1xf32> to vector<16x32xf32>
      %200 = arith.mulf %189, %199 : vector<16x32xf32>
      %201 = vector.broadcast %182 : vector<1x32xf32> to vector<16x32xf32>
      %202 = arith.mulf %201, %200 : vector<16x32xf32>
      %203 = vector.broadcast %183 : vector<1x32xf32> to vector<16x32xf32>
      %204 = arith.addf %202, %203 : vector<16x32xf32>
      %205 = arith.truncf %204 : vector<16x32xf32> to vector<16x32xbf16>
      %c0_83 = arith.constant 0 : index
      %c0_84 = arith.constant 0 : index
      %206 = vector.load %arg19[%c0_83, %c0_84] : memref<32x32xbf16, #tpu.memory_space<vmem>>, vector<32x32xbf16>
      %cst_85 = arith.constant dense<0.000000e+00> : vector<16x32xf32>
      %207 = tpu.matmul %205, %206, %cst_85 {dimension_numbers = #tpu.dot_dimension_numbers<[1], [0], [0], [1], [0, 0, 1, 1], [], []>} : vector<16x32xbf16>, vector<32x32xbf16>, vector<16x32xf32> -> vector<16x32xf32>
      %c0_86 = arith.constant 0 : index
      %c0_87 = arith.constant 0 : index
      %208 = vector.load %arg20[%c0_86, %c0_87] : memref<1x32xf32, #tpu.memory_space<vmem>>, vector<1x32xf32>
      %209 = vector.broadcast %208 : vector<1x32xf32> to vector<16x32xf32>
      %210 = arith.addf %207, %209 : vector<16x32xf32>
      %211 = vector.shape_cast %210 : vector<16x32xf32> to vector<1x16x32xf32>
      %212 = vector.extract_strided_slice %211 {offsets = [0, 0, 0], sizes = [1, 16, 16], strides = [1, 1, 1]} : vector<1x16x32xf32> to vector<1x16x16xf32>
      %213 = vector.extract_strided_slice %211 {offsets = [0, 0, 16], sizes = [1, 16, 16], strides = [1, 1, 1]} : vector<1x16x32xf32> to vector<1x16x16xf32>
      %c0_88 = arith.constant 0 : index
      %c0_89 = arith.constant 0 : index
      %c0_90 = arith.constant 0 : index
      %214 = vector.load %arg21[%c0_88, %c0_89, %c0_90] : memref<1x16x16xf32, #tpu.memory_space<vmem>>, vector<1x16x16xf32>
      %cst_91 = arith.constant 5.000000e-01 : f32
      %215 = vector.broadcast %cst_91 : f32 to vector<1x16x16xf32>
      %216 = arith.mulf %215, %213 : vector<1x16x16xf32>
      %217 = math.exp %216 : vector<1x16x16xf32>
      %218 = arith.mulf %214, %217 : vector<1x16x16xf32>
      %219 = arith.addf %218, %212 : vector<1x16x16xf32>
      %220 = tpu.concatenate %219, %212, %213 in 2 : vector<1x16x16xf32>, vector<1x16x16xf32>, vector<1x16x16xf32> -> vector<1x16x48xf32>
      %c0_92 = arith.constant 0 : index
      %c0_93 = arith.constant 0 : index
      %c0_94 = arith.constant 0 : index
      %221 = vector.load %arg22[%c0_92, %c0_93, %c0_94] : memref<1x16x48xf32, #tpu.memory_space<vmem>>, vector<1x16x48xf32>
      tpu.vector_store %arg22[%c0_92, %c0_93, %c0_94], %220 {strides = array<i32>} : memref<1x16x48xf32, #tpu.memory_space<vmem>>, vector<1x16x48xf32>,
    } else {
    }
    return
  }
  func.func @transform_0(%arg0: i32, %arg1: i32) -> (i32, i32, i32) {
    %c0_i32 = arith.constant 0 : i32
    %c0_i32_0 = arith.constant 0 : i32
    %c0_i32_1 = arith.constant 0 : i32
    return %arg0, %c0_i32, %c0_i32_0 : i32, i32, i32
  }
  func.func @transform_1(%arg0: i32, %arg1: i32) -> (i32, i32, i32) {
    %c0_i32 = arith.constant 0 : i32
    %c0_i32_0 = arith.constant 0 : i32
    %c0_i32_1 = arith.constant 0 : i32
    %c0_i32_2 = arith.constant 0 : i32
    return %c0_i32, %c0_i32_0, %c0_i32_1 : i32, i32, i32
  }
  func.func @transform_2(%arg0: i32, %arg1: i32) -> (i32, i32, i32) {
    %c0_i32 = arith.constant 0 : i32
    %c0_i32_0 = arith.constant 0 : i32
    %c0_i32_1 = arith.constant 0 : i32
    return %arg0, %c0_i32, %c0_i32_0 : i32, i32, i32
  }
  func.func @transform_3(%arg0: i32, %arg1: i32) -> (i32, i32, i32) {
    %c0_i32 = arith.constant 0 : i32
    %c0_i32_0 = arith.constant 0 : i32
    %c0_i32_1 = arith.constant 0 : i32
    return %arg1, %c0_i32, %c0_i32_0 : i32, i32, i32
  }
  func.func @transform_4(%arg0: i32, %arg1: i32) -> (i32, i32, i32) {
    %c0_i32 = arith.constant 0 : i32
    %c0_i32_0 = arith.constant 0 : i32
    %c0_i32_1 = arith.constant 0 : i32
    return %arg1, %c0_i32, %c0_i32_0 : i32, i32, i32
  }
  func.func @transform_5(%arg0: i32, %arg1: i32) -> (i32, i32, i32) {
    %c0_i32 = arith.constant 0 : i32
    %c0_i32_0 = arith.constant 0 : i32
    %c0_i32_1 = arith.constant 0 : i32
    return %arg1, %c0_i32, %c0_i32_0 : i32, i32, i32
  }
  func.func @transform_6(%arg0: i32, %arg1: i32) -> (i32, i32, i32) {
    %c0_i32 = arith.constant 0 : i32
    %c0_i32_0 = arith.constant 0 : i32
    %c0_i32_1 = arith.constant 0 : i32
    return %arg1, %c0_i32, %c0_i32_0 : i32, i32, i32
  }
  func.func @transform_7(%arg0: i32, %arg1: i32) -> (i32, i32, i32) {
    %c0_i32 = arith.constant 0 : i32
    %c0_i32_0 = arith.constant 0 : i32
    %c0_i32_1 = arith.constant 0 : i32
    return %arg1, %c0_i32, %c0_i32_0 : i32, i32, i32
  }
  func.func @transform_8(%arg0: i32, %arg1: i32) -> (i32, i32, i32) {
    %c0_i32 = arith.constant 0 : i32
    %c0_i32_0 = arith.constant 0 : i32
    %c0_i32_1 = arith.constant 0 : i32
    return %arg1, %c0_i32, %c0_i32_0 : i32, i32, i32
  }
  func.func @transform_9(%arg0: i32, %arg1: i32) -> (i32, i32, i32) {
    %c0_i32 = arith.constant 0 : i32
    %c0_i32_0 = arith.constant 0 : i32
    %c0_i32_1 = arith.constant 0 : i32
    return %arg1, %c0_i32, %c0_i32_0 : i32, i32, i32
  }
  func.func @transform_10(%arg0: i32, %arg1: i32) -> (i32, i32, i32) {
    %c0_i32 = arith.constant 0 : i32
    %c0_i32_0 = arith.constant 0 : i32
    %c0_i32_1 = arith.constant 0 : i32
    return %arg1, %c0_i32, %c0_i32_0 : i32, i32, i32
  }
  func.func @transform_11(%arg0: i32, %arg1: i32) -> (i32, i32, i32) {
    %c0_i32 = arith.constant 0 : i32
    %c0_i32_0 = arith.constant 0 : i32
    %c0_i32_1 = arith.constant 0 : i32
    return %arg1, %c0_i32, %c0_i32_0 : i32, i32, i32
  }
  func.func @transform_12(%arg0: i32, %arg1: i32) -> (i32, i32, i32) {
    %c0_i32 = arith.constant 0 : i32
    %c0_i32_0 = arith.constant 0 : i32
    %c0_i32_1 = arith.constant 0 : i32
    return %arg1, %c0_i32, %c0_i32_0 : i32, i32, i32
  }
  func.func @transform_13(%arg0: i32, %arg1: i32) -> (i32, i32, i32) {
    %c0_i32 = arith.constant 0 : i32
    %c0_i32_0 = arith.constant 0 : i32
    %c0_i32_1 = arith.constant 0 : i32
    return %arg1, %c0_i32, %c0_i32_0 : i32, i32, i32
  }
  func.func @transform_14(%arg0: i32, %arg1: i32) -> (i32, i32, i32) {
    %c0_i32 = arith.constant 0 : i32
    %c0_i32_0 = arith.constant 0 : i32
    %c0_i32_1 = arith.constant 0 : i32
    return %arg1, %c0_i32, %c0_i32_0 : i32, i32, i32
  }
  func.func @transform_15(%arg0: i32, %arg1: i32) -> (i32, i32) {
    %c0_i32 = arith.constant 0 : i32
    %c0_i32_0 = arith.constant 0 : i32
    %c0_i32_1 = arith.constant 0 : i32
    return %c0_i32, %c0_i32_0 : i32, i32
  }
  func.func @transform_16(%arg0: i32, %arg1: i32) -> (i32, i32) {
    %c0_i32 = arith.constant 0 : i32
    %c0_i32_0 = arith.constant 0 : i32
    %c0_i32_1 = arith.constant 0 : i32
    return %c0_i32, %c0_i32_0 : i32, i32
  }
  func.func @transform_17(%arg0: i32, %arg1: i32) -> (i32, i32) {
    %c0_i32 = arith.constant 0 : i32
    %c0_i32_0 = arith.constant 0 : i32
    %c0_i32_1 = arith.constant 0 : i32
    return %c0_i32, %c0_i32_0 : i32, i32
  }
  func.func @transform_18(%arg0: i32, %arg1: i32) -> (i32, i32) {
    %c0_i32 = arith.constant 0 : i32
    %c0_i32_0 = arith.constant 0 : i32
    %c0_i32_1 = arith.constant 0 : i32
    return %c0_i32, %c0_i32_0 : i32, i32
  }
  func.func @transform_19(%arg0: i32, %arg1: i32) -> (i32, i32, i32) {
    %c0_i32 = arith.constant 0 : i32
    %c0_i32_0 = arith.constant 0 : i32
    %c0_i32_1 = arith.constant 0 : i32
    return %arg0, %c0_i32, %c0_i32_0 : i32, i32, i32
  }
  func.func @transform_20(%arg0: i32, %arg1: i32) -> (i32, i32, i32) {
    %c0_i32 = arith.constant 0 : i32
    %c0_i32_0 = arith.constant 0 : i32
    %c0_i32_1 = arith.constant 0 : i32
    return %arg0, %c0_i32, %c0_i32_0 : i32, i32, i32
  }
}

</mosaic_0001>

<llo_original>
// kernel: encoder_forward.1
$region0: #{encoder_forward.1}
  #allocation0 [shape = 'u32[]', space=smem, size = 0x4, offset = 0x4, fixed_abs, tag = 'smem constant byte address 0x4 - core index']
  #allocation1 [shape = 'u32[144,128]{1,0:T(1,128)}', space=vmem, size = 0x12000, scoped, tag = 'internal scratch']
  #allocation2 [shape = 'f32[16,32]{1,0:T(8,128)}', space=vmem, size = 0x2000, scoped, tag = 'scratch operand']
  %s0 = inlined_call_operand.vmem [shape: f32[2,16,32], index: 0, kind: input, shape index: {}]
  %s1 = inlined_call_operand.vmem [shape: f32[1,16,32], index: 1, kind: input, shape index: {}]
  %s2 = inlined_call_operand.vmem [shape: f32[2,1,16], index: 2, kind: input, shape index: {}]
  %s3 = inlined_call_operand.vmem [shape: f32[2,1,32], index: 3, kind: input, shape index: {}]
  %s4 = inlined_call_operand.vmem [shape: f32[2,1,32], index: 4, kind: input, shape index: {}]
  %s5 = inlined_call_operand.vmem [shape: bf16[2,32,96], index: 5, kind: input, shape index: {}]
  %s6 = inlined_call_operand.vmem [shape: f32[2,1,96], index: 6, kind: input, shape index: {}]
  %s7 = inlined_call_operand.vmem [shape: bf16[2,32,32], index: 7, kind: input, shape index: {}]
  %s8 = inlined_call_operand.vmem [shape: f32[2,1,32], index: 8, kind: input, shape index: {}]
  %s9 = inlined_call_operand.vmem [shape: f32[2,1,32], index: 9, kind: input, shape index: {}]
  %s10 = inlined_call_operand.vmem [shape: f32[2,1,32], index: 10, kind: input, shape index: {}]
  %s11 = inlined_call_operand.vmem [shape: bf16[2,32,64], index: 11, kind: input, shape index: {}]
  %s12 = inlined_call_operand.vmem [shape: f32[2,1,64], index: 12, kind: input, shape index: {}]
  %s13 = inlined_call_operand.vmem [shape: bf16[2,64,32], index: 13, kind: input, shape index: {}]
  %s14 = inlined_call_operand.vmem [shape: f32[2,1,32], index: 14, kind: input, shape index: {}]
  %s15 = inlined_call_operand.vmem [shape: f32[1,32], index: 15, kind: input, shape index: {}]
  %s16 = inlined_call_operand.vmem [shape: f32[1,32], index: 16, kind: input, shape index: {}]
  %s17 = inlined_call_operand.vmem [shape: bf16[32,32], index: 17, kind: input, shape index: {}]
  %s18 = inlined_call_operand.vmem [shape: f32[1,32], index: 18, kind: input, shape index: {}]
  %s19 = inlined_call_operand.vmem [shape: f32[2,16,16], index: 19, kind: input, shape index: {}]
  %s20 = inlined_call_operand.vmem [shape: f32[2,16,48], index: 20, kind: output, shape index: {}]
  %s21 = sld [smem:[#allocation0]]
  $region121: #{encoder_forward.1} parent=0
    _
  %s23 = ssub.s32 1, %s21
  %s24 = scalar_select 0, %s23, %s21
  loop: start=0, step=1, limit=6
  $region2: #{encoder_forward.1} parent=0 // loop_pre_header
    _
  $region3: #{encoder_forward.1} parent=0 // loop_header
    %s26 = sphi 0, %s30
    %p27 = scmp.ge.s32.totalorder %s26, 6
    %s33 = sphi 0, %s45
    %s34 = sphi 0, %s41
    %s35 = sphi 0, %s33
    %s36 = sphi 0, %s34
    %s37 = sphi 0, %s35
    %s38 = sphi 0, %s36
    %s48 = sphi 0, %s50
    %s51 = sphi 0, %s48
    %s52 = sphi 0, %s51
    %s68 = sphi 0, %s52
    %s72 = sphi 0, %s72
    %s74 = sphi 0, %s72
    %s75 = sphi 0, %s74
    %s89 = sphi 0, %s75
    %s95 = sphi 0, %s97
    %s98 = sphi 0, %s95
    %s99 = sphi 0, %s98
    %s115 = sphi 0, %s99
    %s121 = sphi 0, %s123
    %s124 = sphi 0, %s121
    %s125 = sphi 0, %s124
    %s141 = sphi 0, %s125
    %s147 = sphi 0, %s149
    %s150 = sphi 0, %s147
    %s151 = sphi 0, %s150
    %s167 = sphi 0, %s151
    %s173 = sphi 0, %s175
    %s176 = sphi 0, %s173
    %s177 = sphi 0, %s176
    %s193 = sphi 0, %s177
    %s199 = sphi 0, %s201
    %s202 = sphi 0, %s199
    %s203 = sphi 0, %s202
    %s219 = sphi 0, %s203
    %s225 = sphi 0, %s227
    %s228 = sphi 0, %s225
    %s229 = sphi 0, %s228
    %s245 = sphi 0, %s229
    %s251 = sphi 0, %s253
    %s254 = sphi 0, %s251
    %s255 = sphi 0, %s254
    %s271 = sphi 0, %s255
    %s277 = sphi 0, %s279
    %s280 = sphi 0, %s277
    %s281 = sphi 0, %s280
    %s297 = sphi 0, %s281
    %s303 = sphi 0, %s305
    %s306 = sphi 0, %s303
    %s307 = sphi 0, %s306
    %s323 = sphi 0, %s307
    %s329 = sphi 0, %s331
    %s332 = sphi 0, %s329
    %s333 = sphi 0, %s332
    %s349 = sphi 0, %s333
    %s355 = sphi 0, %s357
    %s358 = sphi 0, %s355
    %s359 = sphi 0, %s358
    %s375 = sphi 0, %s359
    %s381 = sphi 0, %s383
    %s384 = sphi 0, %s381
    %s385 = sphi 0, %s384
    %s401 = sphi 0, %s385
    %s407 = sphi 0, %s409
    %s410 = sphi 0, %s407
    %s411 = sphi 0, %s410
    %s427 = sphi 0, %s411
    %s431 = sphi 0, %s431
    %s433 = sphi 0, %s431
    %s434 = sphi 0, %s433
    %s448 = sphi 0, %s434
    %s452 = sphi 0, %s452
    %s454 = sphi 0, %s452
    %s455 = sphi 0, %s454
    %s469 = sphi 0, %s455
    %s473 = sphi 0, %s473
    %s475 = sphi 0, %s473
    %s476 = sphi 0, %s475
    %s490 = sphi 0, %s476
    %s494 = sphi 0, %s494
    %s496 = sphi 0, %s494
    %s497 = sphi 0, %s496
    %s511 = sphi 0, %s497
    %s517 = sphi 0, %s519
    %s520 = sphi 0, %s517
    %s521 = sphi 0, %s520
    %s537 = sphi 0, %s521
    %s543 = sphi 0, %s545
    %s546 = sphi 0, %s543
    %s547 = sphi 0, %s546
    %s563 = sphi 0, %s547
  $region4: #{encoder_forward.1} parent=0 // loop_header_branch
    %29 = sbr.rel (%p27) target = $region8
  $region5: #{encoder_forward.1} parent=0 // loop_body
    %s31 = ssub.s32 %s26, 1
    %s32 = ssub.s32 %s26, 2
    %s39 = sadd.s32 1, %s34
    %p40 = scmp.ge.s32.totalorder %s39, 2
    %s41 = scalar_select %p40, 0, %s39
    %s42 = sadd.s32 1, %s33
    %s43 = scalar_select %p40, %s42, %s33
    %p44 = scmp.ge.s32.totalorder %s43, 2
    %s45 = scalar_select %p44, 0, %s43
    %s46 = ssub.s32 %s33, %s45
    %p47 = scmp.eq.s32.totalorder %s46, 0
    %s49 = sadd.s32 %s48, 1
    %s50 = scalar_select %p47, %s48, %s49
    %p53 = pneg %p47
    %p54 = scmp.eq.s32.totalorder %s26, 3
    %p55 = por %p53, %p54
    %p56 = scmp.ne.s32.totalorder %s48, %s51
    %p57 = scmp.eq.s32.totalorder %s26, 0
    %p58 = por %p56, %p57
    %p59 = scmp.ne.s32.totalorder %s48, %s51
    %p60 = scmp.eq.s32.totalorder %s31, 3
    %p61 = por %p59, %p60
    %p62 = scmp.ne.s32.totalorder %s51, %s52
    %p63 = scmp.eq.s32.totalorder %s31, 0
    %p64 = por %p62, %p63
    %p65 = scmp.ne.s32.totalorder %s51, %s52
    %p66 = scmp.eq.s32.totalorder %s32, 3
    %p67 = por %p65, %p66
    %p69 = scmp.ne.s32.totalorder %s52, %s68
    %p70 = scmp.eq.s32.totalorder %s32, 0
    %p71 = por %p69, %p70
    %s73 = sadd.s32 %s72, 1
    %p76 = scmp.eq.s32.totalorder %s26, 3
    %p77 = scmp.ne.s32.totalorder %s72, %s74
    %p78 = scmp.eq.s32.totalorder %s26, 0
    %p79 = por %p77, %p78
    %p80 = scmp.ne.s32.totalorder %s72, %s74
    %p81 = scmp.eq.s32.totalorder %s31, 3
    %p82 = por %p80, %p81
    %p83 = scmp.ne.s32.totalorder %s74, %s75
    %p84 = scmp.eq.s32.totalorder %s31, 0
    %p85 = por %p83, %p84
    %p86 = scmp.ne.s32.totalorder %s74, %s75
    %p87 = scmp.eq.s32.totalorder %s32, 3
    %p88 = por %p86, %p87
    %p90 = scmp.ne.s32.totalorder %s75, %s89
    %p91 = scmp.eq.s32.totalorder %s32, 0
    %p92 = por %p90, %p91
    %s93 = ssub.s32 %s33, %s45
    %p94 = scmp.eq.s32.totalorder %s93, 0
    %s96 = sadd.s32 %s95, 1
    %s97 = scalar_select %p94, %s95, %s96
    %p100 = pneg %p94
    %p101 = scmp.eq.s32.totalorder %s26, 3
    %p102 = por %p100, %p101
    %p103 = scmp.ne.s32.totalorder %s95, %s98
    %p104 = scmp.eq.s32.totalorder %s26, 0
    %p105 = por %p103, %p104
    %p106 = scmp.ne.s32.totalorder %s95, %s98
    %p107 = scmp.eq.s32.totalorder %s31, 3
    %p108 = por %p106, %p107
    %p109 = scmp.ne.s32.totalorder %s98, %s99
    %p110 = scmp.eq.s32.totalorder %s31, 0
    %p111 = por %p109, %p110
    %p112 = scmp.ne.s32.totalorder %s98, %s99
    %p113 = scmp.eq.s32.totalorder %s32, 3
    %p114 = por %p112, %p113
    %p116 = scmp.ne.s32.totalorder %s99, %s115
    %p117 = scmp.eq.s32.totalorder %s32, 0
    %p118 = por %p116, %p117
    %s119 = ssub.s32 %s34, %s41
    %p120 = scmp.eq.s32.totalorder %s119, 0
    %s122 = sadd.s32 %s121, 1
    %s123 = scalar_select %p120, %s121, %s122
    %p126 = pneg %p120
    %p127 = scmp.eq.s32.totalorder %s26, 3
    %p128 = por %p126, %p127
    %p129 = scmp.ne.s32.totalorder %s121, %s124
    %p130 = scmp.eq.s32.totalorder %s26, 0
    %p131 = por %p129, %p130
    %p132 = scmp.ne.s32.totalorder %s121, %s124
    %p133 = scmp.eq.s32.totalorder %s31, 3
    %p134 = por %p132, %p133
    %p135 = scmp.ne.s32.totalorder %s124, %s125
    %p136 = scmp.eq.s32.totalorder %s31, 0
    %p137 = por %p135, %p136
    %p138 = scmp.ne.s32.totalorder %s124, %s125
    %p139 = scmp.eq.s32.totalorder %s32, 3
    %p140 = por %p138, %p139
    %p142 = scmp.ne.s32.totalorder %s125, %s141
    %p143 = scmp.eq.s32.totalorder %s32, 0
    %p144 = por %p142, %p143
    %s145 = ssub.s32 %s34, %s41
    %p146 = scmp.eq.s32.totalorder %s145, 0
    %s148 = sadd.s32 %s147, 1
    %s149 = scalar_select %p146, %s147, %s148
    %p152 = pneg %p146
    %p153 = scmp.eq.s32.totalorder %s26, 3
    %p154 = por %p152, %p153
    %p155 = scmp.ne.s32.totalorder %s147, %s150
    %p156 = scmp.eq.s32.totalorder %s26, 0
    %p157 = por %p155, %p156
    %p158 = scmp.ne.s32.totalorder %s147, %s150
    %p159 = scmp.eq.s32.totalorder %s31, 3
    %p160 = por %p158, %p159
    %p161 = scmp.ne.s32.totalorder %s150, %s151
    %p162 = scmp.eq.s32.totalorder %s31, 0
    %p163 = por %p161, %p162
    %p164 = scmp.ne.s32.totalorder %s150, %s151
    %p165 = scmp.eq.s32.totalorder %s32, 3
    %p166 = por %p164, %p165
    %p168 = scmp.ne.s32.totalorder %s151, %s167
    %p169 = scmp.eq.s32.totalorder %s32, 0
    %p170 = por %p168, %p169
    %s171 = ssub.s32 %s34, %s41
    %p172 = scmp.eq.s32.totalorder %s171, 0
    %s174 = sadd.s32 %s173, 1
    %s175 = scalar_select %p172, %s173, %s174
    %p178 = pneg %p172
    %p179 = scmp.eq.s32.totalorder %s26, 3
    %p180 = por %p178, %p179
    %p181 = scmp.ne.s32.totalorder %s173, %s176
    %p182 = scmp.eq.s32.totalorder %s26, 0
    %p183 = por %p181, %p182
    %p184 = scmp.ne.s32.totalorder %s173, %s176
    %p185 = scmp.eq.s32.totalorder %s31, 3
    %p186 = por %p184, %p185
    %p187 = scmp.ne.s32.totalorder %s176, %s177
    %p188 = scmp.eq.s32.totalorder %s31, 0
    %p189 = por %p187, %p188
    %p190 = scmp.ne.s32.totalorder %s176, %s177
    %p191 = scmp.eq.s32.totalorder %s32, 3
    %p192 = por %p190, %p191
    %p194 = scmp.ne.s32.totalorder %s177, %s193
    %p195 = scmp.eq.s32.totalorder %s32, 0
    %p196 = por %p194, %p195
    %s197 = ssub.s32 %s34, %s41
    %p198 = scmp.eq.s32.totalorder %s197, 0
    %s200 = sadd.s32 %s199, 1
    %s201 = scalar_select %p198, %s199, %s200
    %p204 = pneg %p198
    %p205 = scmp.eq.s32.totalorder %s26, 3
    %p206 = por %p204, %p205
    %p207 = scmp.ne.s32.totalorder %s199, %s202
    %p208 = scmp.eq.s32.totalorder %s26, 0
    %p209 = por %p207, %p208
    %p210 = scmp.ne.s32.totalorder %s199, %s202
    %p211 = scmp.eq.s32.totalorder %s31, 3
    %p212 = por %p210, %p211
    %p213 = scmp.ne.s32.totalorder %s202, %s203
    %p214 = scmp.eq.s32.totalorder %s31, 0
    %p215 = por %p213, %p214
    %p216 = scmp.ne.s32.totalorder %s202, %s203
    %p217 = scmp.eq.s32.totalorder %s32, 3
    %p218 = por %p216, %p217
    %p220 = scmp.ne.s32.totalorder %s203, %s219
    %p221 = scmp.eq.s32.totalorder %s32, 0
    %p222 = por %p220, %p221
    %s223 = ssub.s32 %s34, %s41
    %p224 = scmp.eq.s32.totalorder %s223, 0
    %s226 = sadd.s32 %s225, 1
    %s227 = scalar_select %p224, %s225, %s226
    %p230 = pneg %p224
    %p231 = scmp.eq.s32.totalorder %s26, 3
    %p232 = por %p230, %p231
    %p233 = scmp.ne.s32.totalorder %s225, %s228
    %p234 = scmp.eq.s32.totalorder %s26, 0
    %p235 = por %p233, %p234
    %p236 = scmp.ne.s32.totalorder %s225, %s228
    %p237 = scmp.eq.s32.totalorder %s31, 3
    %p238 = por %p236, %p237
    %p239 = scmp.ne.s32.totalorder %s228, %s229
    %p240 = scmp.eq.s32.totalorder %s31, 0
    %p241 = por %p239, %p240
    %p242 = scmp.ne.s32.totalorder %s228, %s229
    %p243 = scmp.eq.s32.totalorder %s32, 3
    %p244 = por %p242, %p243
    %p246 = scmp.ne.s32.totalorder %s229, %s245
    %p247 = scmp.eq.s32.totalorder %s32, 0
    %p248 = por %p246, %p247
    %s249 = ssub.s32 %s34, %s41
    %p250 = scmp.eq.s32.totalorder %s249, 0
    %s252 = sadd.s32 %s251, 1
    %s253 = scalar_select %p250, %s251, %s252
    %p256 = pneg %p250
    %p257 = scmp.eq.s32.totalorder %s26, 3
    %p258 = por %p256, %p257
    %p259 = scmp.ne.s32.totalorder %s251, %s254
    %p260 = scmp.eq.s32.totalorder %s26, 0
    %p261 = por %p259, %p260
    %p262 = scmp.ne.s32.totalorder %s251, %s254
    %p263 = scmp.eq.s32.totalorder %s31, 3
    %p264 = por %p262, %p263
    %p265 = scmp.ne.s32.totalorder %s254, %s255
    %p266 = scmp.eq.s32.totalorder %s31, 0
    %p267 = por %p265, %p266
    %p268 = scmp.ne.s32.totalorder %s254, %s255
    %p269 = scmp.eq.s32.totalorder %s32, 3
    %p270 = por %p268, %p269
    %p272 = scmp.ne.s32.totalorder %s255, %s271
    %p273 = scmp.eq.s32.totalorder %s32, 0
    %p274 = por %p272, %p273
    %s275 = ssub.s32 %s34, %s41
    %p276 = scmp.eq.s32.totalorder %s275, 0
    %s278 = sadd.s32 %s277, 1
    %s279 = scalar_select %p276, %s277, %s278
    %p282 = pneg %p276
    %p283 = scmp.eq.s32.totalorder %s26, 3
    %p284 = por %p282, %p283
    %p285 = scmp.ne.s32.totalorder %s277, %s280
    %p286 = scmp.eq.s32.totalorder %s26, 0
    %p287 = por %p285, %p286
    %p288 = scmp.ne.s32.totalorder %s277, %s280
    %p289 = scmp.eq.s32.totalorder %s31, 3
    %p290 = por %p288, %p289
    %p291 = scmp.ne.s32.totalorder %s280, %s281
    %p292 = scmp.eq.s32.totalorder %s31, 0
    %p293 = por %p291, %p292
    %p294 = scmp.ne.s32.totalorder %s280, %s281
    %p295 = scmp.eq.s32.totalorder %s32, 3
    %p296 = por %p294, %p295
    %p298 = scmp.ne.s32.totalorder %s281, %s297
    %p299 = scmp.eq.s32.totalorder %s32, 0
    %p300 = por %p298, %p299
    %s301 = ssub.s32 %s34, %s41
    %p302 = scmp.eq.s32.totalorder %s301, 0
    %s304 = sadd.s32 %s303, 1
    %s305 = scalar_select %p302, %s303, %s304
    %p308 = pneg %p302
    %p309 = scmp.eq.s32.totalorder %s26, 3
    %p310 = por %p308, %p309
    %p311 = scmp.ne.s32.totalorder %s303, %s306
    %p312 = scmp.eq.s32.totalorder %s26, 0
    %p313 = por %p311, %p312
    %p314 = scmp.ne.s32.totalorder %s303, %s306
    %p315 = scmp.eq.s32.totalorder %s31, 3
    %p316 = por %p314, %p315
    %p317 = scmp.ne.s32.totalorder %s306, %s307
    %p318 = scmp.eq.s32.totalorder %s31, 0
    %p319 = por %p317, %p318
    %p320 = scmp.ne.s32.totalorder %s306, %s307
    %p321 = scmp.eq.s32.totalorder %s32, 3
    %p322 = por %p320, %p321
    %p324 = scmp.ne.s32.totalorder %s307, %s323
    %p325 = scmp.eq.s32.totalorder %s32, 0
    %p326 = por %p324, %p325
    %s327 = ssub.s32 %s34, %s41
    %p328 = scmp.eq.s32.totalorder %s327, 0
    %s330 = sadd.s32 %s329, 1
    %s331 = scalar_select %p328, %s329, %s330
    %p334 = pneg %p328
    %p335 = scmp.eq.s32.totalorder %s26, 3
    %p336 = por %p334, %p335
    %p337 = scmp.ne.s32.totalorder %s329, %s332
    %p338 = scmp.eq.s32.totalorder %s26, 0
    %p339 = por %p337, %p338
    %p340 = scmp.ne.s32.totalorder %s329, %s332
    %p341 = scmp.eq.s32.totalorder %s31, 3
    %p342 = por %p340, %p341
    %p343 = scmp.ne.s32.totalorder %s332, %s333
    %p344 = scmp.eq.s32.totalorder %s31, 0
    %p345 = por %p343, %p344
    %p346 = scmp.ne.s32.totalorder %s332, %s333
    %p347 = scmp.eq.s32.totalorder %s32, 3
    %p348 = por %p346, %p347
    %p350 = scmp.ne.s32.totalorder %s333, %s349
    %p351 = scmp.eq.s32.totalorder %s32, 0
    %p352 = por %p350, %p351
    %s353 = ssub.s32 %s34, %s41
    %p354 = scmp.eq.s32.totalorder %s353, 0
    %s356 = sadd.s32 %s355, 1
    %s357 = scalar_select %p354, %s355, %s356
    %p360 = pneg %p354
    %p361 = scmp.eq.s32.totalorder %s26, 3
    %p362 = por %p360, %p361
    %p363 = scmp.ne.s32.totalorder %s355, %s358
    %p364 = scmp.eq.s32.totalorder %s26, 0
    %p365 = por %p363, %p364
    %p366 = scmp.ne.s32.totalorder %s355, %s358
    %p367 = scmp.eq.s32.totalorder %s31, 3
    %p368 = por %p366, %p367
    %p369 = scmp.ne.s32.totalorder %s358, %s359
    %p370 = scmp.eq.s32.totalorder %s31, 0
    %p371 = por %p369, %p370
    %p372 = scmp.ne.s32.totalorder %s358, %s359
    %p373 = scmp.eq.s32.totalorder %s32, 3
    %p374 = por %p372, %p373
    %p376 = scmp.ne.s32.totalorder %s359, %s375
    %p377 = scmp.eq.s32.totalorder %s32, 0
    %p378 = por %p376, %p377
    %s379 = ssub.s32 %s34, %s41
    %p380 = scmp.eq.s32.totalorder %s379, 0
    %s382 = sadd.s32 %s381, 1
    %s383 = scalar_select %p380, %s381, %s382
    %p386 = pneg %p380
    %p387 = scmp.eq.s32.totalorder %s26, 3
    %p388 = por %p386, %p387
    %p389 = scmp.ne.s32.totalorder %s381, %s384
    %p390 = scmp.eq.s32.totalorder %s26, 0
    %p391 = por %p389, %p390
    %p392 = scmp.ne.s32.totalorder %s381, %s384
    %p393 = scmp.eq.s32.totalorder %s31, 3
    %p394 = por %p392, %p393
    %p395 = scmp.ne.s32.totalorder %s384, %s385
    %p396 = scmp.eq.s32.totalorder %s31, 0
    %p397 = por %p395, %p396
    %p398 = scmp.ne.s32.totalorder %s384, %s385
    %p399 = scmp.eq.s32.totalorder %s32, 3
    %p400 = por %p398, %p399
    %p402 = scmp.ne.s32.totalorder %s385, %s401
    %p403 = scmp.eq.s32.totalorder %s32, 0
    %p404 = por %p402, %p403
    %s405 = ssub.s32 %s34, %s41
    %p406 = scmp.eq.s32.totalorder %s405, 0
    %s408 = sadd.s32 %s407, 1
    %s409 = scalar_select %p406, %s407, %s408
    %p412 = pneg %p406
    %p413 = scmp.eq.s32.totalorder %s26, 3
    %p414 = por %p412, %p413
    %p415 = scmp.ne.s32.totalorder %s407, %s410
    %p416 = scmp.eq.s32.totalorder %s26, 0
    %p417 = por %p415, %p416
    %p418 = scmp.ne.s32.totalorder %s407, %s410
    %p419 = scmp.eq.s32.totalorder %s31, 3
    %p420 = por %p418, %p419
    %p421 = scmp.ne.s32.totalorder %s410, %s411
    %p422 = scmp.eq.s32.totalorder %s31, 0
    %p423 = por %p421, %p422
    %p424 = scmp.ne.s32.totalorder %s410, %s411
    %p425 = scmp.eq.s32.totalorder %s32, 3
    %p426 = por %p424, %p425
    %p428 = scmp.ne.s32.totalorder %s411, %s427
    %p429 = scmp.eq.s32.totalorder %s32, 0
    %p430 = por %p428, %p429
    %s432 = sadd.s32 %s431, 1
    %p435 = scmp.eq.s32.totalorder %s26, 3
    %p436 = scmp.ne.s32.totalorder %s431, %s433
    %p437 = scmp.eq.s32.totalorder %s26, 0
    %p438 = por %p436, %p437
    %p439 = scmp.ne.s32.totalorder %s431, %s433
    %p440 = scmp.eq.s32.totalorder %s31, 3
    %p441 = por %p439, %p440
    %p442 = scmp.ne.s32.totalorder %s433, %s434
    %p443 = scmp.eq.s32.totalorder %s31, 0
    %p444 = por %p442, %p443
    %p445 = scmp.ne.s32.totalorder %s433, %s434
    %p446 = scmp.eq.s32.totalorder %s32, 3
    %p447 = por %p445, %p446
    %p449 = scmp.ne.s32.totalorder %s434, %s448
    %p450 = scmp.eq.s32.totalorder %s32, 0
    %p451 = por %p449, %p450
    %s453 = sadd.s32 %s452, 1
    %p456 = scmp.eq.s32.totalorder %s26, 3
    %p457 = scmp.ne.s32.totalorder %s452, %s454
    %p458 = scmp.eq.s32.totalorder %s26, 0
    %p459 = por %p457, %p458
    %p460 = scmp.ne.s32.totalorder %s452, %s454
    %p461 = scmp.eq.s32.totalorder %s31, 3
    %p462 = por %p460, %p461
    %p463 = scmp.ne.s32.totalorder %s454, %s455
    %p464 = scmp.eq.s32.totalorder %s31, 0
    %p465 = por %p463, %p464
    %p466 = scmp.ne.s32.totalorder %s454, %s455
    %p467 = scmp.eq.s32.totalorder %s32, 3
    %p468 = por %p466, %p467
    %p470 = scmp.ne.s32.totalorder %s455, %s469
    %p471 = scmp.eq.s32.totalorder %s32, 0
    %p472 = por %p470, %p471
    %s474 = sadd.s32 %s473, 1
    %p477 = scmp.eq.s32.totalorder %s26, 3
    %p478 = scmp.ne.s32.totalorder %s473, %s475
    %p479 = scmp.eq.s32.totalorder %s26, 0
    %p480 = por %p478, %p479
    %p481 = scmp.ne.s32.totalorder %s473, %s475
    %p482 = scmp.eq.s32.totalorder %s31, 3
    %p483 = por %p481, %p482
    %p484 = scmp.ne.s32.totalorder %s475, %s476
    %p485 = scmp.eq.s32.totalorder %s31, 0
    %p486 = por %p484, %p485
    %p487 = scmp.ne.s32.totalorder %s475, %s476
    %p488 = scmp.eq.s32.totalorder %s32, 3
    %p489 = por %p487, %p488
    %p491 = scmp.ne.s32.totalorder %s476, %s490
    %p492 = scmp.eq.s32.totalorder %s32, 0
    %p493 = por %p491, %p492
    %s495 = sadd.s32 %s494, 1
    %p498 = scmp.eq.s32.totalorder %s26, 3
    %p499 = scmp.ne.s32.totalorder %s494, %s496
    %p500 = scmp.eq.s32.totalorder %s26, 0
    %p501 = por %p499, %p500
    %p502 = scmp.ne.s32.totalorder %s494, %s496
    %p503 = scmp.eq.s32.totalorder %s31, 3
    %p504 = por %p502, %p503
    %p505 = scmp.ne.s32.totalorder %s496, %s497
    %p506 = scmp.eq.s32.totalorder %s31, 0
    %p507 = por %p505, %p506
    %p508 = scmp.ne.s32.totalorder %s496, %s497
    %p509 = scmp.eq.s32.totalorder %s32, 3
    %p510 = por %p508, %p509
    %p512 = scmp.ne.s32.totalorder %s497, %s511
    %p513 = scmp.eq.s32.totalorder %s32, 0
    %p514 = por %p512, %p513
    %s515 = ssub.s32 %s33, %s45
    %p516 = scmp.eq.s32.totalorder %s515, 0
    %s518 = sadd.s32 %s517, 1
    %s519 = scalar_select %p516, %s517, %s518
    %p522 = pneg %p516
    %p523 = scmp.eq.s32.totalorder %s26, 3
    %p524 = por %p522, %p523
    %p525 = scmp.ne.s32.totalorder %s517, %s520
    %p526 = scmp.eq.s32.totalorder %s26, 0
    %p527 = por %p525, %p526
    %p528 = scmp.ne.s32.totalorder %s517, %s520
    %p529 = scmp.eq.s32.totalorder %s31, 3
    %p530 = por %p528, %p529
    %p531 = scmp.ne.s32.totalorder %s520, %s521
    %p532 = scmp.eq.s32.totalorder %s31, 0
    %p533 = por %p531, %p532
    %p534 = scmp.ne.s32.totalorder %s520, %s521
    %p535 = scmp.eq.s32.totalorder %s32, 3
    %p536 = por %p534, %p535
    %p538 = scmp.ne.s32.totalorder %s521, %s537
    %p539 = scmp.eq.s32.totalorder %s32, 0
    %p540 = por %p538, %p539
    %s541 = ssub.s32 %s33, %s45
    %p542 = scmp.eq.s32.totalorder %s541, 0
    %s544 = sadd.s32 %s543, 1
    %s545 = scalar_select %p542, %s543, %s544
    %p548 = pneg %p542
    %p549 = scmp.eq.s32.totalorder %s26, 3
    %p550 = por %p548, %p549
    %p551 = scmp.ne.s32.totalorder %s543, %s546
    %p552 = scmp.eq.s32.totalorder %s26, 0
    %p553 = por %p551, %p552
    %p554 = scmp.ne.s32.totalorder %s543, %s546
    %p555 = scmp.eq.s32.totalorder %s31, 3
    %p556 = por %p554, %p555
    %p557 = scmp.ne.s32.totalorder %s546, %s547
    %p558 = scmp.eq.s32.totalorder %s31, 0
    %p559 = por %p557, %p558
    %p560 = scmp.ne.s32.totalorder %s546, %s547
    %p561 = scmp.eq.s32.totalorder %s32, 3
    %p562 = por %p560, %p561
    %p564 = scmp.ne.s32.totalorder %s547, %s563
    %p565 = scmp.eq.s32.totalorder %s32, 0
    %p566 = por %p564, %p565
    %p567 = scmp.le.s32.totalorder 1, %s26
    %p568 = scmp.lt.s32.totalorder %s26, 5
    %p569 = pnand %p567, %p568
    %p570 = pneg %p569
    // Predicated region
    $region9: #{encoder_forward.1} parent=5 // pred_check
      _
    $region10: #{encoder_forward.1} parent=5 // pred_check_branch
      %572 = sbr.rel (%p569) target = $region12
    $region11: #{encoder_forward.1} parent=5 // pred_region
      %s573 = ssub.s32 %s26, 1
      // Predicated region
      $region13: #{encoder_forward.1} parent=11 // pred_check
        %p574 = pneg %p85
      $region14: #{encoder_forward.1} parent=11 // pred_check_branch
        %576 = sbr.rel (%p574) target = $region16
      $region15: #{encoder_forward.1} parent=11 // pred_region
        _
      $region16: #{encoder_forward.1} parent=11 // pred_fallthru
        _
      // Predicated region
      $region17: #{encoder_forward.1} parent=11 // pred_check
        %p577 = pneg %p444
      $region18: #{encoder_forward.1} parent=11 // pred_check_branch
        %579 = sbr.rel (%p577) target = $region20
      $region19: #{encoder_forward.1} parent=11 // pred_region
        _
      $region20: #{encoder_forward.1} parent=11 // pred_fallthru
        _
      // Predicated region
      $region21: #{encoder_forward.1} parent=11 // pred_check
        %p580 = pneg %p465
      $region22: #{encoder_forward.1} parent=11 // pred_check_branch
        %582 = sbr.rel (%p580) target = $region24
      $region23: #{encoder_forward.1} parent=11 // pred_region
        _
      $region24: #{encoder_forward.1} parent=11 // pred_fallthru
        _
      // Predicated region
      $region25: #{encoder_forward.1} parent=11 // pred_check
        %p583 = pneg %p486
      $region26: #{encoder_forward.1} parent=11 // pred_check_branch
        %585 = sbr.rel (%p583) target = $region28
      $region27: #{encoder_forward.1} parent=11 // pred_region
        _
      $region28: #{encoder_forward.1} parent=11 // pred_fallthru
        _
      // Predicated region
      $region29: #{encoder_forward.1} parent=11 // pred_check
        %p586 = pneg %p507
      $region30: #{encoder_forward.1} parent=11 // pred_check_branch
        %588 = sbr.rel (%p586) target = $region32
      $region31: #{encoder_forward.1} parent=11 // pred_region
        _
      $region32: #{encoder_forward.1} parent=11 // pred_fallthru
        _
    $region12: #{encoder_forward.1} parent=5 // pred_fallthru
      _
    %p589 = scmp.lt.s32.totalorder %s26, 4
    // Predicated region
    $region33: #{encoder_forward.1} parent=5 // pred_check
      %p590 = pneg %p589
    $region34: #{encoder_forward.1} parent=5 // pred_check_branch
      %592 = sbr.rel (%p590) target = $region36
    $region35: #{encoder_forward.1} parent=5 // pred_region
      // Predicated region
      $region37: #{encoder_forward.1} parent=35 // pred_check
        %p593 = pneg %p58
      $region38: #{encoder_forward.1} parent=35 // pred_check_branch
        %595 = sbr.rel (%p593) target = $region40
      $region39: #{encoder_forward.1} parent=35 // pred_region
        %p596 = scmp.lt.s32.totalorder %s33, 1
        %s597 = scalar_select %p596, %s33, 1
        %s598 = smul.addr %s597, 2
        %s599 = smul.addr %s598, 8
        %s600 = scalar_lea.vmem %s0, %s599
      $region40: #{encoder_forward.1} parent=35 // pred_fallthru
        _
      // Predicated region
      $region41: #{encoder_forward.1} parent=35 // pred_check
        %p601 = pneg %p105
      $region42: #{encoder_forward.1} parent=35 // pred_check_branch
        %603 = sbr.rel (%p601) target = $region44
      $region43: #{encoder_forward.1} parent=35 // pred_region
        %p604 = scmp.lt.s32.totalorder %s33, 1
        %s605 = scalar_select %p604, %s33, 1
        %s606 = scalar_lea.vmem %s2, %s605
      $region44: #{encoder_forward.1} parent=35 // pred_fallthru
        _
      // Predicated region
      $region45: #{encoder_forward.1} parent=35 // pred_check
        %p607 = pneg %p131
      $region46: #{encoder_forward.1} parent=35 // pred_check_branch
        %609 = sbr.rel (%p607) target = $region48
      $region47: #{encoder_forward.1} parent=35 // pred_region
        %p610 = scmp.lt.s32.totalorder %s34, 1
        %s611 = scalar_select %p610, %s34, 1
        %s612 = scalar_lea.vmem %s3, %s611
      $region48: #{encoder_forward.1} parent=35 // pred_fallthru
        _
      // Predicated region
      $region49: #{encoder_forward.1} parent=35 // pred_check
        %p613 = pneg %p157
      $region50: #{encoder_forward.1} parent=35 // pred_check_branch
        %615 = sbr.rel (%p613) target = $region52
      $region51: #{encoder_forward.1} parent=35 // pred_region
        %p616 = scmp.lt.s32.totalorder %s34, 1
        %s617 = scalar_select %p616, %s34, 1
        %s618 = scalar_lea.vmem %s4, %s617
      $region52: #{encoder_forward.1} parent=35 // pred_fallthru
        _
      // Predicated region
      $region53: #{encoder_forward.1} parent=35 // pred_check
        %p619 = pneg %p183
      $region54: #{encoder_forward.1} parent=35 // pred_check_branch
        %621 = sbr.rel (%p619) target = $region56
      $region55: #{encoder_forward.1} parent=35 // pred_region
        %p622 = scmp.lt.s32.totalorder %s34, 1
        %s623 = scalar_select %p622, %s34, 1
        %s624 = smul.addr %s623, 4
        %s625 = smul.addr %s624, 4
        %s626 = scalar_lea.vmem %s5, %s625
      $region56: #{encoder_forward.1} parent=35 // pred_fallthru
        _
      // Predicated region
      $region57: #{encoder_forward.1} parent=35 // pred_check
        %p627 = pneg %p209
      $region58: #{encoder_forward.1} parent=35 // pred_check_branch
        %629 = sbr.rel (%p627) target = $region60
      $region59: #{encoder_forward.1} parent=35 // pred_region
        %p630 = scmp.lt.s32.totalorder %s34, 1
        %s631 = scalar_select %p630, %s34, 1
        %s632 = scalar_lea.vmem %s6, %s631
      $region60: #{encoder_forward.1} parent=35 // pred_fallthru
        _
      // Predicated region
      $region61: #{encoder_forward.1} parent=35 // pred_check
        %p633 = pneg %p235
      $region62: #{encoder_forward.1} parent=35 // pred_check_branch
        %635 = sbr.rel (%p633) target = $region64
      $region63: #{encoder_forward.1} parent=35 // pred_region
        %p636 = scmp.lt.s32.totalorder %s34, 1
        %s637 = scalar_select %p636, %s34, 1
        %s638 = smul.addr %s637, 4
        %s639 = smul.addr %s638, 4
        %s640 = scalar_lea.vmem %s7, %s639
      $region64: #{encoder_forward.1} parent=35 // pred_fallthru
        _
      // Predicated region
      $region65: #{encoder_forward.1} parent=35 // pred_check
        %p641 = pneg %p261
      $region66: #{encoder_forward.1} parent=35 // pred_check_branch
        %643 = sbr.rel (%p641) target = $region68
      $region67: #{encoder_forward.1} parent=35 // pred_region
        %p644 = scmp.lt.s32.totalorder %s34, 1
        %s645 = scalar_select %p644, %s34, 1
        %s646 = scalar_lea.vmem %s8, %s645
      $region68: #{encoder_forward.1} parent=35 // pred_fallthru
        _
      // Predicated region
      $region69: #{encoder_forward.1} parent=35 // pred_check
        %p647 = pneg %p287
      $region70: #{encoder_forward.1} parent=35 // pred_check_branch
        %649 = sbr.rel (%p647) target = $region72
      $region71: #{encoder_forward.1} parent=35 // pred_region
        %p650 = scmp.lt.s32.totalorder %s34, 1
        %s651 = scalar_select %p650, %s34, 1
        %s652 = scalar_lea.vmem %s9, %s651
      $region72: #{encoder_forward.1} parent=35 // pred_fallthru
        _
      // Predicated region
      $region73: #{encoder_forward.1} parent=35 // pred_check
        %p653 = pneg %p313
      $region74: #{encoder_forward.1} parent=35 // pred_check_branch
        %655 = sbr.rel (%p653) target = $region76
      $region75: #{encoder_forward.1} parent=35 // pred_region
        %p656 = scmp.lt.s32.totalorder %s34, 1
        %s657 = scalar_select %p656, %s34, 1
        %s658 = scalar_lea.vmem %s10, %s657
      $region76: #{encoder_forward.1} parent=35 // pred_fallthru
        _
      // Predicated region
      $region77: #{encoder_forward.1} parent=35 // pred_check
        %p659 = pneg %p339
      $region78: #{encoder_forward.1} parent=35 // pred_check_branch
        %661 = sbr.rel (%p659) target = $region80
      $region79: #{encoder_forward.1} parent=35 // pred_region
        %p662 = scmp.lt.s32.totalorder %s34, 1
        %s663 = scalar_select %p662, %s34, 1
        %s664 = smul.addr %s663, 4
        %s665 = smul.addr %s664, 4
        %s666 = scalar_lea.vmem %s11, %s665
      $region80: #{encoder_forward.1} parent=35 // pred_fallthru
        _
      // Predicated region
      $region81: #{encoder_forward.1} parent=35 // pred_check
        %p667 = pneg %p365
      $region82: #{encoder_forward.1} parent=35 // pred_check_branch
        %669 = sbr.rel (%p667) target = $region84
      $region83: #{encoder_forward.1} parent=35 // pred_region
        %p670 = scmp.lt.s32.totalorder %s34, 1
        %s671 = scalar_select %p670, %s34, 1
        %s672 = scalar_lea.vmem %s12, %s671
      $region84: #{encoder_forward.1} parent=35 // pred_fallthru
        _
      // Predicated region
      $region85: #{encoder_forward.1} parent=35 // pred_check
        %p673 = pneg %p391
      $region86: #{encoder_forward.1} parent=35 // pred_check_branch
        %675 = sbr.rel (%p673) target = $region88
      $region87: #{encoder_forward.1} parent=35 // pred_region
        %p676 = scmp.lt.s32.totalorder %s34, 1
        %s677 = scalar_select %p676, %s34, 1
        %s678 = smul.addr %s677, 8
        %s679 = smul.addr %s678, 4
        %s680 = scalar_lea.vmem %s13, %s679
      $region88: #{encoder_forward.1} parent=35 // pred_fallthru
        _
      // Predicated region
      $region89: #{encoder_forward.1} parent=35 // pred_check
        %p681 = pneg %p417
      $region90: #{encoder_forward.1} parent=35 // pred_check_branch
        %683 = sbr.rel (%p681) target = $region92
      $region91: #{encoder_forward.1} parent=35 // pred_region
        %p684 = scmp.lt.s32.totalorder %s34, 1
        %s685 = scalar_select %p684, %s34, 1
        %s686 = scalar_lea.vmem %s14, %s685
      $region92: #{encoder_forward.1} parent=35 // pred_fallthru
        _
      // Predicated region
      $region93: #{encoder_forward.1} parent=35 // pred_check
        %p687 = pneg %p527
      $region94: #{encoder_forward.1} parent=35 // pred_check_branch
        %689 = sbr.rel (%p687) target = $region96
      $region95: #{encoder_forward.1} parent=35 // pred_region
        %p690 = scmp.lt.s32.totalorder %s33, 1
        %s691 = scalar_select %p690, %s33, 1
        %s692 = smul.addr %s691, 2
        %s693 = smul.addr %s692, 8
        %s694 = scalar_lea.vmem %s19, %s693
      $region96: #{encoder_forward.1} parent=35 // pred_fallthru
        _
    $region36: #{encoder_forward.1} parent=5 // pred_fallthru
      _
    %p695 = scmp.le.s32.totalorder 1, %s26
    %p696 = scmp.lt.s32.totalorder %s26, 5
    %p697 = pnand %p695, %p696
    %p698 = pneg %p697
    // Predicated region
    $region97: #{encoder_forward.1} parent=5 // pred_check
      _
    $region98: #{encoder_forward.1} parent=5 // pred_check_branch
      %700 = sbr.rel (%p697) target = $region100
    $region99: #{encoder_forward.1} parent=5 // pred_region
      %s701 = ssub.s32 %s26, 1
      %p702 = scmp.lt.s32.totalorder %s35, 1
      %s703 = scalar_select %p702, %s35, 1
      %s704 = smul.addr %s703, 2
      %s705 = smul.addr %s704, 8
      %s706 = scalar_lea.vmem %s0, %s705
      %p707 = pneg %p64
      %p708 = pneg %p61
      %p709 = pneg %p85
      %p710 = pneg %p82
      %p711 = scmp.lt.s32.totalorder %s35, 1
      %s712 = scalar_select %p711, %s35, 1
      %s713 = scalar_lea.vmem %s2, %s712
      %p714 = pneg %p111
      %p715 = pneg %p108
      %p716 = scmp.lt.s32.totalorder %s36, 1
      %s717 = scalar_select %p716, %s36, 1
      %s718 = scalar_lea.vmem %s3, %s717
      %p719 = pneg %p137
      %p720 = pneg %p134
      %p721 = scmp.lt.s32.totalorder %s36, 1
      %s722 = scalar_select %p721, %s36, 1
      %s723 = scalar_lea.vmem %s4, %s722
      %p724 = pneg %p163
      %p725 = pneg %p160
      %p726 = scmp.lt.s32.totalorder %s36, 1
      %s727 = scalar_select %p726, %s36, 1
      %s728 = smul.addr %s727, 4
      %s729 = smul.addr %s728, 4
      %s730 = scalar_lea.vmem %s5, %s729
      %p731 = pneg %p189
      %p732 = pneg %p186
      %p733 = scmp.lt.s32.totalorder %s36, 1
      %s734 = scalar_select %p733, %s36, 1
      %s735 = scalar_lea.vmem %s6, %s734
      %p736 = pneg %p215
      %p737 = pneg %p212
      %p738 = scmp.lt.s32.totalorder %s36, 1
      %s739 = scalar_select %p738, %s36, 1
      %s740 = smul.addr %s739, 4
      %s741 = smul.addr %s740, 4
      %s742 = scalar_lea.vmem %s7, %s741
      %p743 = pneg %p241
      %p744 = pneg %p238
      %p745 = scmp.lt.s32.totalorder %s36, 1
      %s746 = scalar_select %p745, %s36, 1
      %s747 = scalar_lea.vmem %s8, %s746
      %p748 = pneg %p267
      %p749 = pneg %p264
      %p750 = scmp.lt.s32.totalorder %s36, 1
      %s751 = scalar_select %p750, %s36, 1
      %s752 = scalar_lea.vmem %s9, %s751
      %p753 = pneg %p293
      %p754 = pneg %p290
      %p755 = scmp.lt.s32.totalorder %s36, 1
      %s756 = scalar_select %p755, %s36, 1
      %s757 = scalar_lea.vmem %s10, %s756
      %p758 = pneg %p319
      %p759 = pneg %p316
      %p760 = scmp.lt.s32.totalorder %s36, 1
      %s761 = scalar_select %p760, %s36, 1
      %s762 = smul.addr %s761, 4
      %s763 = smul.addr %s762, 4
      %s764 = scalar_lea.vmem %s11, %s763
      %p765 = pneg %p345
      %p766 = pneg %p342
      %p767 = scmp.lt.s32.totalorder %s36, 1
      %s768 = scalar_select %p767, %s36, 1
      %s769 = scalar_lea.vmem %s12, %s768
      %p770 = pneg %p371
      %p771 = pneg %p368
      %p772 = scmp.lt.s32.totalorder %s36, 1
      %s773 = scalar_select %p772, %s36, 1
      %s774 = smul.addr %s773, 8
      %s775 = smul.addr %s774, 4
      %s776 = scalar_lea.vmem %s13, %s775
      %p777 = pneg %p397
      %p778 = pneg %p394
      %p779 = scmp.lt.s32.totalorder %s36, 1
      %s780 = scalar_select %p779, %s36, 1
      %s781 = scalar_lea.vmem %s14, %s780
      %p782 = pneg %p423
      %p783 = pneg %p420
      %p784 = pneg %p444
      %p785 = pneg %p441
      %p786 = pneg %p465
      %p787 = pneg %p462
      %p788 = pneg %p486
      %p789 = pneg %p483
      %p790 = pneg %p507
      %p791 = pneg %p504
      %p792 = scmp.lt.s32.totalorder %s35, 1
      %s793 = scalar_select %p792, %s35, 1
      %s794 = smul.addr %s793, 2
      %s795 = smul.addr %s794, 8
      %s796 = scalar_lea.vmem %s19, %s795
      %p797 = pneg %p533
      %p798 = pneg %p530
      %p799 = pneg %p559
      %p800 = pneg %p556
      %p801 = scmp.lt.s32.totalorder %s35, 1
      %s802 = scalar_select %p801, %s35, 1
      %s803 = smul.addr %s802, 2
      %s804 = smul.addr %s803, 8
      %s805 = scalar_lea.vmem %s20, %s804
      %p806 = scmp.lt.s32.totalorder %s35, 1
      %s807 = scalar_select %p806, %s35, 1
      %s808 = smul.addr %s807, 2
      %s809 = smul.addr %s808, 8
      %s810 = scalar_lea.vmem %s0, %s809
      %p811 = scmp.lt.s32.totalorder %s35, 1
      %s812 = scalar_select %p811, %s35, 1
      %s813 = scalar_lea.vmem %s2, %s812
      %p814 = scmp.lt.s32.totalorder %s36, 1
      %s815 = scalar_select %p814, %s36, 1
      %s816 = scalar_lea.vmem %s3, %s815
      %p817 = scmp.lt.s32.totalorder %s36, 1
      %s818 = scalar_select %p817, %s36, 1
      %s819 = scalar_lea.vmem %s4, %s818
      %p820 = scmp.lt.s32.totalorder %s36, 1
      %s821 = scalar_select %p820, %s36, 1
      %s822 = smul.addr %s821, 4
      %s823 = smul.addr %s822, 4
      %s824 = scalar_lea.vmem %s5, %s823
      %p825 = scmp.lt.s32.totalorder %s36, 1
      %s826 = scalar_select %p825, %s36, 1
      %s827 = scalar_lea.vmem %s6, %s826
      %p828 = scmp.lt.s32.totalorder %s36, 1
      %s829 = scalar_select %p828, %s36, 1
      %s830 = smul.addr %s829, 4
      %s831 = smul.addr %s830, 4
      %s832 = scalar_lea.vmem %s7, %s831
      %p833 = scmp.lt.s32.totalorder %s36, 1
      %s834 = scalar_select %p833, %s36, 1
      %s835 = scalar_lea.vmem %s8, %s834
      %p836 = scmp.lt.s32.totalorder %s36, 1
      %s837 = scalar_select %p836, %s36, 1
      %s838 = scalar_lea.vmem %s9, %s837
      %p839 = scmp.lt.s32.totalorder %s36, 1
      %s840 = scalar_select %p839, %s36, 1
      %s841 = scalar_lea.vmem %s10, %s840
      %p842 = scmp.lt.s32.totalorder %s36, 1
      %s843 = scalar_select %p842, %s36, 1
      %s844 = smul.addr %s843, 4
      %s845 = smul.addr %s844, 4
      %s846 = scalar_lea.vmem %s11, %s845
      %p847 = scmp.lt.s32.totalorder %s36, 1
      %s848 = scalar_select %p847, %s36, 1
      %s849 = scalar_lea.vmem %s12, %s848
      %p850 = scmp.lt.s32.totalorder %s36, 1
      %s851 = scalar_select %p850, %s36, 1
      %s852 = smul.addr %s851, 8
      %s853 = smul.addr %s852, 4
      %s854 = scalar_lea.vmem %s13, %s853
      %p855 = scmp.lt.s32.totalorder %s36, 1
      %s856 = scalar_select %p855, %s36, 1
      %s857 = scalar_lea.vmem %s14, %s856
      %p858 = scmp.lt.s32.totalorder %s35, 1
      %s859 = scalar_select %p858, %s35, 1
      %s860 = smul.addr %s859, 2
      %s861 = smul.addr %s860, 8
      %s862 = scalar_lea.vmem %s19, %s861
      %p863 = scmp.lt.s32.totalorder %s35, 1
      %s864 = scalar_select %p863, %s35, 1
      %s865 = smul.addr %s864, 2
      %s866 = smul.addr %s865, 8
      %s867 = scalar_lea.vmem %s20, %s866
      %p869 = scmp.eq.s32.totalorder %s36, 0
      // Predicated region
      $region101: #{encoder_forward.1} parent=99 // pred_check
        %p870 = pneg %p869
      $region102: #{encoder_forward.1} parent=99 // pred_check_branch
        %872 = sbr.rel (%p870) target = $region104
      $region103: #{encoder_forward.1} parent=99 // pred_region
        %v873 = vld [vmem:[%s810] sm:$0xff]
        %v874 = vld [vmem:[%s810 + $0x8] sm:$0xff]
        %v875 = vld [vmem:[%s1] sm:$0xff]
        %v876 = vld [vmem:[%s1 + $0x8] sm:$0xff]
        %v877 = vadd.f32 %v873, %v875
        %v878 = vadd.f32 %v874, %v876
        %vm879 = vcmask 261120
        %880 = vst.msk [vmem:[#allocation2] sm:$0xff] %vm879, %v877
        %881 = vst.msk [vmem:[#allocation2 + $0x8] sm:$0xff] %vm879, %v878
      $region104: #{encoder_forward.1} parent=99 // pred_fallthru
        _
      %v882 = vld [vmem:[#allocation2] sm:$0xff]
      %v883 = vld [vmem:[#allocation2 + $0x8] sm:$0xff]
      %v884 = vld [vmem:[%s813] sm:$0x1]
      %v885 = vld [vmem:[%s816] sm:$0x1]
      %v886 = vld [vmem:[%s819] sm:$0x1]
      %vm887 = vcmask 261120
      %v888 = vsel %vm887, %v882, 0.0
      %889 = vadd.xlane.f32.xlu0 %v888
      %v890 = vpop.xlane.xlu0 %889
      %v891 = vsel %vm887, %v883, 0.0
      %892 = vadd.xlane.f32.xlu0 %v891
      %v893 = vpop.xlane.xlu0 %892
      %v894 = vrcp.pop 32.0
      %v895 = vmul.f32 %v890, %v894
      %v896 = vmul.f32 %v893, %v894
      %v897 = vsub.f32 %v882, %v895
      %v898 = vsub.f32 %v883, %v896
      %v899 = vmul.f32 %v897, %v897
      %v900 = vmul.f32 %v898, %v898
      %v901 = vsel %vm887, %v899, 0.0
      %902 = vadd.xlane.f32.xlu0 %v901
      %v903 = vpop.xlane.xlu0 %902
      %v904 = vsel %vm887, %v900, 0.0
      %905 = vadd.xlane.f32.xlu0 %v904
      %v906 = vpop.xlane.xlu0 %905
      %v907 = vmul.f32 %v903, 0.032258064
      %v908 = vmul.f32 %v906, 0.032258064
      %v909 = vrsqrt.pop %v907
      %v910 = vmul.f32 %v907, %v909
      %vm911 = vcmp.eq.f32.partialorder %v907, inf
      %v912 = vsel %vm911, %v907, %v910
      %vm913 = vcmp.eq.f32.partialorder %v907, 0.0
      %v914 = vand.u32 %v907, 2147483648
      %v915 = vsel %vm913, %v914, %v912
      %v916 = vrsqrt.pop %v908
      %v917 = vmul.f32 %v908, %v916
      %vm918 = vcmp.eq.f32.partialorder %v908, inf
      %v919 = vsel %vm918, %v908, %v917
      %vm920 = vcmp.eq.f32.partialorder %v908, 0.0
      %v921 = vand.u32 %v908, 2147483648
      %v922 = vsel %vm920, %v921, %v919
      %v923 = vadd.f32 %v915, 1e-06
      %v924 = vadd.f32 %v922, 1e-06
      %v925 = vrcp.pop %v923
      %v926 = vrcp.pop %v924
      %v927 = vmul.f32 %v897, %v925
      %v928 = vmul.f32 %v898, %v926
      %v930 = vlaneseq
      %v931 = vshrl.u32 %v930, 7
      %v932 = vsub.s32 0, %v931
      %v933 = vrot.slane %v885, %v932
      %v935 = vmul.f32 %v933, %v927
      %v936 = vmul.f32 %v933, %v928
      %v938 = vlaneseq
      %v939 = vshrl.u32 %v938, 7
      %v940 = vsub.s32 0, %v939
      %v941 = vrot.slane %v886, %v940
      %v943 = vadd.f32 %v935, %v941
      %v944 = vadd.f32 %v936, %v941
      %v945 = vpack.c.bf16 %v944, %v943
      %v946 = vld [vmem:[%s824] sm:$0xf]
      %v947 = vld [vmem:[%s824 + $0x4] sm:$0xf]
      %v948 = vld [vmem:[%s824 + $0x8] sm:$0xf]
      %v949 = vld [vmem:[%s824 + $0xc] sm:$0xf]
      %v950 = vld [vmem:[%s827] sm:$0x1]
      %v952 = vlaneseq
      %v953 = vshrl.u32 %v952, 7
      %v954 = vsub.s32 0, %v953
      %v955 = vrot.slane %v950, %v954
      %v961 = vunpack.c.l.b16 %v946
      %v962 = vunpack.c.l.b16 %v947
      %v963 = vunpack.c.l.b16 %v948
      %v964 = vunpack.c.l.b16 %v949
      %v965 = vpack.c.b16 %v962, %v961
      %v966 = vpack.c.b16 %v964, %v963
      %v970 = vsel %vm887, %v945, 0
      %972 = vmatprep.subr.bf16.mxu0 0
      %973 = vmatpush1.bf16.msra.mxu0 %v965
      %974 = vmatprep.subr.bf16.mxu0 0
      %975 = vmatpush1.bf16.msra.mxu0 %v966
      %976 = vmatprep.subr.bf16.mxu0 0
      %977 = vmatpush1.bf16.msra.mxu0 0
      %978 = vmatprep.subr.bf16.mxu0 0
      %979 = vmatpush1.bf16.msra.mxu0 0
      %980 = vmatprep.subr.bf16.mxu0 0
      %981 = vmatpush1.bf16.msra.mxu0 0
      %982 = vmatprep.subr.bf16.mxu0 0
      %983 = vmatpush1.bf16.msra.mxu0 0
      %984 = vmatprep.subr.bf16.mxu0 0
      %985 = vmatpush1.bf16.msra.mxu0 0
      %986 = vmatprep.subr.bf16.mxu0 0
      %987 = vmatpush1.bf16.msra.mxu0 0
      %988 = vmatprep.subr.bf16.mxu0 0
      %989 = vmatpush1.bf16.msra.mxu0 0
      %990 = vmatprep.subr.bf16.mxu0 0
      %991 = vmatpush1.bf16.msra.mxu0 0
      %992 = vmatprep.subr.bf16.mxu0 0
      %993 = vmatpush1.bf16.msra.mxu0 0
      %994 = vmatprep.subr.bf16.mxu0 0
      %995 = vmatpush1.bf16.msra.mxu0 0
      %996 = vmatprep.subr.bf16.mxu0 0
      %997 = vmatpush1.bf16.msra.mxu0 0
      %998 = vmatprep.subr.bf16.mxu0 0
      %999 = vmatpush1.bf16.msra.mxu0 0
      %1000 = vmatprep.subr.bf16.mxu0 0
      %1001 = vmatpush1.bf16.msra.mxu0 0
      %1002 = vmatprep.subr.bf16.mxu0 0
      %1003 = vmatpush1.bf16.msra.mxu0 0
      %1004 = vmatprep.mubr.bf16.mxu0 0
      %1005 = vmatmul.mubr.bf16.gmra.mrb[0].mxu0 %v970
      %v1006 = vpop.f32.mrb[0].mxu0
      %v1007 = vadd.f32 %v955, %v1006
      %v1008 = vpop.f32.mrb[0].mxu0
      %v1009 = vpop.f32.mrb[0].mxu0
      %v1010 = vadd.f32 %v955, %v1009
      %v1011 = vpop.f32.mrb[0].mxu0
      %1012 = vdwg.mxu0
      %v1013 = vpack.c.bf16 %v1010, %v1007
      %v1015 = vlaneseq
      %v1016 = vshrl.u32 %v1015, 7
      %v1017 = vsub.s32 0, %v1016
      %v1018 = vrot.slane %v884, %v1017
      %1021 = vrot.lane.b32.xlu0 %v1013, 96
      %v1022 = vpop.permute.xlu0 %1021
      %vm1023 = vcmask 64512
      %v1025 = vsel %vm1023, %v1013, 0
      %v1028 = vsel %vm1023, %v1022, 0
      %1030 = vmatprep.subr.bf16.mxu0 0
      %1031 = vmatpush1.bf16.xpose.msra.mxu0 %v1028
      %1032 = vmatprep.subr.bf16.mxu0 0
      %1033 = vmatpush1.bf16.xpose.msra.mxu0 0
      %1034 = vmatprep.subr.bf16.mxu0 0
      %1035 = vmatpush1.bf16.xpose.msra.mxu0 0
      %1036 = vmatprep.subr.bf16.mxu0 0
      %1037 = vmatpush1.bf16.xpose.msra.mxu0 0
      %1038 = vmatprep.subr.bf16.mxu0 0
      %1039 = vmatpush1.bf16.xpose.msra.mxu0 0
      %1040 = vmatprep.subr.bf16.mxu0 0
      %1041 = vmatpush1.bf16.xpose.msra.mxu0 0
      %1042 = vmatprep.subr.bf16.mxu0 0
      %1043 = vmatpush1.bf16.xpose.msra.mxu0 0
      %1044 = vmatprep.subr.bf16.mxu0 0
      %1045 = vmatpush1.bf16.xpose.msra.mxu0 0
      %1046 = vmatprep.subr.bf16.mxu0 0
      %1047 = vmatpush1.bf16.xpose.msra.mxu0 0
      %1048 = vmatprep.subr.bf16.mxu0 0
      %1049 = vmatpush1.bf16.xpose.msra.mxu0 0
      %1050 = vmatprep.subr.bf16.mxu0 0
      %1051 = vmatpush1.bf16.xpose.msra.mxu0 0
      %1052 = vmatprep.subr.bf16.mxu0 0
      %1053 = vmatpush1.bf16.xpose.msra.mxu0 0
      %1054 = vmatprep.subr.bf16.mxu0 0
      %1055 = vmatpush1.bf16.xpose.msra.mxu0 0
      %1056 = vmatprep.subr.bf16.mxu0 0
      %1057 = vmatpush1.bf16.xpose.msra.mxu0 0
      %1058 = vmatprep.subr.bf16.mxu0 0
      %1059 = vmatpush1.bf16.xpose.msra.mxu0 0
      %1060 = vmatprep.subr.bf16.mxu0 0
      %1061 = vmatpush1.bf16.xpose.msra.mxu0 0
      %1062 = vmatprep.mubr.bf16.mxu0 0
      %1063 = vmatmul.mubr.bf16.gmra.mrb[0].mxu0 %v1025
      %v1064 = vpop.f32.mrb[0].mxu0
      %v1065 = vadd.f32 %v1018, %v1064
      %v1066 = vpop.f32.mrb[0].mxu0
      %v1067 = vpop.f32.mrb[0].mxu0
      %v1068 = vadd.f32 %v1018, %v1067
      %v1069 = vpop.f32.mrb[0].mxu0
      %1070 = vdwg.mxu0
      %vm1071 = vcmask 130048
      %v1072 = vsel %vm1071, %v1065, -inf
      %1073 = vmax.xlane.f32.xlu0 %v1072
      %v1074 = vpop.xlane.xlu0 %1073
      %v1075 = vsel %vm1071, %v1068, -inf
      %1076 = vmax.xlane.f32.xlu0 %v1075
      %v1077 = vpop.xlane.xlu0 %1076
      %v1078 = vsub.f32 %v1065, %v1074
      %v1079 = vsub.f32 %v1068, %v1077
      %v1080 = vmul.f32 %v1078, 1.442695
      %v1081 = vpow.pop %v1080
      %v1082 = vmul.f32 %v1079, 1.442695
      %v1083 = vpow.pop %v1082
      %v1084 = vsel %vm1071, %v1081, 0.0
      %1085 = vadd.xlane.f32.xlu0 %v1084
      %v1086 = vpop.xlane.xlu0 %1085
      %v1087 = vsel %vm1071, %v1083, 0.0
      %1088 = vadd.xlane.f32.xlu0 %v1087
      %v1089 = vpop.xlane.xlu0 %1088
      %v1090 = vrcp.pop %v1086
      %v1091 = vrcp.pop %v1089
      %v1092 = vmul.f32 %v1081, %v1090
      %v1093 = vmul.f32 %v1083, %v1091
      %v1094 = vpack.c.bf16 %v1093, %v1092
      %1095 = vrot.lane.b32.xlu0 %v1013, 64
      %v1096 = vpop.permute.xlu0 %1095
      %v1099 = vsel %vm1071, %v1094, 0
      %1101 = vmatprep.subr.bf16.mxu0 0
      %1102 = vmatpush1.bf16.msra.mxu0 %v1096
      %1103 = vmatprep.subr.bf16.mxu0 0
      %1104 = vmatpush1.bf16.msra.mxu0 0
      %1105 = vmatprep.subr.bf16.mxu0 0
      %1106 = vmatpush1.bf16.msra.mxu0 0
      %1107 = vmatprep.subr.bf16.mxu0 0
      %1108 = vmatpush1.bf16.msra.mxu0 0
      %1109 = vmatprep.subr.bf16.mxu0 0
      %1110 = vmatpush1.bf16.msra.mxu0 0
      %1111 = vmatprep.subr.bf16.mxu0 0
      %1112 = vmatpush1.bf16.msra.mxu0 0
      %1113 = vmatprep.subr.bf16.mxu0 0
      %1114 = vmatpush1.bf16.msra.mxu0 0
      %1115 = vmatprep.subr.bf16.mxu0 0
      %1116 = vmatpush1.bf16.msra.mxu0 0
      %1117 = vmatprep.subr.bf16.mxu0 0
      %1118 = vmatpush1.bf16.msra.mxu0 0
      %1119 = vmatprep.subr.bf16.mxu0 0
      %1120 = vmatpush1.bf16.msra.mxu0 0
      %1121 = vmatprep.subr.bf16.mxu0 0
      %1122 = vmatpush1.bf16.msra.mxu0 0
      %1123 = vmatprep.subr.bf16.mxu0 0
      %1124 = vmatpush1.bf16.msra.mxu0 0
      %1125 = vmatprep.subr.bf16.mxu0 0
      %1126 = vmatpush1.bf16.msra.mxu0 0
      %1127 = vmatprep.subr.bf16.mxu0 0
      %1128 = vmatpush1.bf16.msra.mxu0 0
      %1129 = vmatprep.subr.bf16.mxu0 0
      %1130 = vmatpush1.bf16.msra.mxu0 0
      %1131 = vmatprep.subr.bf16.mxu0 0
      %1132 = vmatpush1.bf16.msra.mxu0 0
      %1133 = vmatprep.mubr.bf16.mxu0 0
      %1134 = vmatmul.mubr.bf16.gmra.mrb[0].mxu0 %v1099
      %v1135 = vpop.f32.mrb[0].mxu0
      %v1136 = vadd.f32 0.0, %v1135
      %v1137 = vpop.f32.mrb[0].mxu0
      %v1138 = vpop.f32.mrb[0].mxu0
      %v1139 = vadd.f32 0.0, %v1138
      %v1140 = vpop.f32.mrb[0].mxu0
      %1141 = vdwg.mxu0
      %1142 = vrot.lane.b32.xlu0 %v1013, 120
      %v1143 = vpop.permute.xlu0 %1142
      %1144 = vrot.lane.b32.xlu0 %v1013, 88
      %v1145 = vpop.permute.xlu0 %1144
      %v1147 = vsel %vm1023, %v1143, 0
      %v1150 = vsel %vm1023, %v1145, 0
      %1152 = vmatprep.subr.bf16.mxu0 0
      %1153 = vmatpush1.bf16.xpose.msra.mxu0 %v1150
      %1154 = vmatprep.subr.bf16.mxu0 0
      %1155 = vmatpush1.bf16.xpose.msra.mxu0 0
      %1156 = vmatprep.subr.bf16.mxu0 0
      %1157 = vmatpush1.bf16.xpose.msra.mxu0 0
      %1158 = vmatprep.subr.bf16.mxu0 0
      %1159 = vmatpush1.bf16.xpose.msra.mxu0 0
      %1160 = vmatprep.subr.bf16.mxu0 0
      %1161 = vmatpush1.bf16.xpose.msra.mxu0 0
      %1162 = vmatprep.subr.bf16.mxu0 0
      %1163 = vmatpush1.bf16.xpose.msra.mxu0 0
      %1164 = vmatprep.subr.bf16.mxu0 0
      %1165 = vmatpush1.bf16.xpose.msra.mxu0 0
      %1166 = vmatprep.subr.bf16.mxu0 0
      %1167 = vmatpush1.bf16.xpose.msra.mxu0 0
      %1168 = vmatprep.subr.bf16.mxu0 0
      %1169 = vmatpush1.bf16.xpose.msra.mxu0 0
      %1170 = vmatprep.subr.bf16.mxu0 0
      %1171 = vmatpush1.bf16.xpose.msra.mxu0 0
      %1172 = vmatprep.subr.bf16.mxu0 0
      %1173 = vmatpush1.bf16.xpose.msra.mxu0 0
      %1174 = vmatprep.subr.bf16.mxu0 0
      %1175 = vmatpush1.bf16.xpose.msra.mxu0 0
      %1176 = vmatprep.subr.bf16.mxu0 0
      %1177 = vmatpush1.bf16.xpose.msra.mxu0 0
      %1178 = vmatprep.subr.bf16.mxu0 0
      %1179 = vmatpush1.bf16.xpose.msra.mxu0 0
      %1180 = vmatprep.subr.bf16.mxu0 0
      %1181 = vmatpush1.bf16.xpose.msra.mxu0 0
      %1182 = vmatprep.subr.bf16.mxu0 0
      %1183 = vmatpush1.bf16.xpose.msra.mxu0 0
      %1184 = vmatprep.mubr.bf16.mxu0 0
      %1185 = vmatmul.mubr.bf16.gmra.mrb[0].mxu0 %v1147
      %v1186 = vpop.f32.mrb[0].mxu0
      %v1187 = vadd.f32 %v1018, %v1186
      %v1188 = vpop.f32.mrb[0].mxu0
      %v1189 = vpop.f32.mrb[0].mxu0
      %v1190 = vadd.f32 %v1018, %v1189
      %v1191 = vpop.f32.mrb[0].mxu0
      %1192 = vdwg.mxu0
      %v1193 = vsel %vm1071, %v1187, -inf
      %1194 = vmax.xlane.f32.xlu0 %v1193
      %v1195 = vpop.xlane.xlu0 %1194
      %v1196 = vsel %vm1071, %v1190, -inf
      %1197 = vmax.xlane.f32.xlu0 %v1196
      %v1198 = vpop.xlane.xlu0 %1197
      %v1199 = vsub.f32 %v1187, %v1195
      %v1200 = vsub.f32 %v1190, %v1198
      %v1201 = vmul.f32 %v1199, 1.442695
      %v1202 = vpow.pop %v1201
      %v1203 = vmul.f32 %v1200, 1.442695
      %v1204 = vpow.pop %v1203
      %v1205 = vsel %vm1071, %v1202, 0.0
      %1206 = vadd.xlane.f32.xlu0 %v1205
      %v1207 = vpop.xlane.xlu0 %1206
      %v1208 = vsel %vm1071, %v1204, 0.0
      %1209 = vadd.xlane.f32.xlu0 %v1208
      %v1210 = vpop.xlane.xlu0 %1209
      %v1211 = vrcp.pop %v1207
      %v1212 = vrcp.pop %v1210
      %v1213 = vmul.f32 %v1202, %v1211
      %v1214 = vmul.f32 %v1204, %v1212
      %v1215 = vpack.c.bf16 %v1214, %v1213
      %1216 = vrot.lane.b32.xlu0 %v1013, 56
      %v1217 = vpop.permute.xlu0 %1216
      %v1220 = vsel %vm1071, %v1215, 0
      %1222 = vmatprep.subr.bf16.mxu0 0
      %1223 = vmatpush1.bf16.msra.mxu0 %v1217
      %1224 = vmatprep.subr.bf16.mxu0 0
      %1225 = vmatpush1.bf16.msra.mxu0 0
      %1226 = vmatprep.subr.bf16.mxu0 0
      %1227 = vmatpush1.bf16.msra.mxu0 0
      %1228 = vmatprep.subr.bf16.mxu0 0
      %1229 = vmatpush1.bf16.msra.mxu0 0
      %1230 = vmatprep.subr.bf16.mxu0 0
      %1231 = vmatpush1.bf16.msra.mxu0 0
      %1232 = vmatprep.subr.bf16.mxu0 0
      %1233 = vmatpush1.bf16.msra.mxu0 0
      %1234 = vmatprep.subr.bf16.mxu0 0
      %1235 = vmatpush1.bf16.msra.mxu0 0
      %1236 = vmatprep.subr.bf16.mxu0 0
      %1237 = vmatpush1.bf16.msra.mxu0 0
      %1238 = vmatprep.subr.bf16.mxu0 0
      %1239 = vmatpush1.bf16.msra.mxu0 0
      %1240 = vmatprep.subr.bf16.mxu0 0
      %1241 = vmatpush1.bf16.msra.mxu0 0
      %1242 = vmatprep.subr.bf16.mxu0 0
      %1243 = vmatpush1.bf16.msra.mxu0 0
      %1244 = vmatprep.subr.bf16.mxu0 0
      %1245 = vmatpush1.bf16.msra.mxu0 0
      %1246 = vmatprep.subr.bf16.mxu0 0
      %1247 = vmatpush1.bf16.msra.mxu0 0
      %1248 = vmatprep.subr.bf16.mxu0 0
      %1249 = vmatpush1.bf16.msra.mxu0 0
      %1250 = vmatprep.subr.bf16.mxu0 0
      %1251 = vmatpush1.bf16.msra.mxu0 0
      %1252 = vmatprep.subr.bf16.mxu0 0
      %1253 = vmatpush1.bf16.msra.mxu0 0
      %1254 = vmatprep.mubr.bf16.mxu0 0
      %1255 = vmatmul.mubr.bf16.gmra.mrb[0].mxu0 %v1220
      %v1256 = vpop.f32.mrb[0].mxu0
      %v1257 = vadd.f32 0.0, %v1256
      %v1258 = vpop.f32.mrb[0].mxu0
      %v1259 = vpop.f32.mrb[0].mxu0
      %v1260 = vadd.f32 0.0, %v1259
      %v1261 = vpop.f32.mrb[0].mxu0
      %1262 = vdwg.mxu0
      %1263 = vrot.lane.b32.xlu0 %v1013, 112
      %v1264 = vpop.permute.xlu0 %1263
      %1265 = vrot.lane.b32.xlu0 %v1013, 80
      %v1266 = vpop.permute.xlu0 %1265
      %v1268 = vsel %vm1023, %v1264, 0
      %v1271 = vsel %vm1023, %v1266, 0
      %1273 = vmatprep.subr.bf16.mxu0 0
      %1274 = vmatpush1.bf16.xpose.msra.mxu0 %v1271
      %1275 = vmatprep.subr.bf16.mxu0 0
      %1276 = vmatpush1.bf16.xpose.msra.mxu0 0
      %1277 = vmatprep.subr.bf16.mxu0 0
      %1278 = vmatpush1.bf16.xpose.msra.mxu0 0
      %1279 = vmatprep.subr.bf16.mxu0 0
      %1280 = vmatpush1.bf16.xpose.msra.mxu0 0
      %1281 = vmatprep.subr.bf16.mxu0 0
      %1282 = vmatpush1.bf16.xpose.msra.mxu0 0
      %1283 = vmatprep.subr.bf16.mxu0 0
      %1284 = vmatpush1.bf16.xpose.msra.mxu0 0
      %1285 = vmatprep.subr.bf16.mxu0 0
      %1286 = vmatpush1.bf16.xpose.msra.mxu0 0
      %1287 = vmatprep.subr.bf16.mxu0 0
      %1288 = vmatpush1.bf16.xpose.msra.mxu0 0
      %1289 = vmatprep.subr.bf16.mxu0 0
      %1290 = vmatpush1.bf16.xpose.msra.mxu0 0
      %1291 = vmatprep.subr.bf16.mxu0 0
      %1292 = vmatpush1.bf16.xpose.msra.mxu0 0
      %1293 = vmatprep.subr.bf16.mxu0 0
      %1294 = vmatpush1.bf16.xpose.msra.mxu0 0
      %1295 = vmatprep.subr.bf16.mxu0 0
      %1296 = vmatpush1.bf16.xpose.msra.mxu0 0
      %1297 = vmatprep.subr.bf16.mxu0 0
      %1298 = vmatpush1.bf16.xpose.msra.mxu0 0
      %1299 = vmatprep.subr.bf16.mxu0 0
      %1300 = vmatpush1.bf16.xpose.msra.mxu0 0
      %1301 = vmatprep.subr.bf16.mxu0 0
      %1302 = vmatpush1.bf16.xpose.msra.mxu0 0
      %1303 = vmatprep.subr.bf16.mxu0 0
      %1304 = vmatpush1.bf16.xpose.msra.mxu0 0
      %1305 = vmatprep.mubr.bf16.mxu0 0
      %1306 = vmatmul.mubr.bf16.gmra.mrb[0].mxu0 %v1268
      %v1307 = vpop.f32.mrb[0].mxu0
      %v1308 = vadd.f32 %v1018, %v1307
      %v1309 = vpop.f32.mrb[0].mxu0
      %v1310 = vpop.f32.mrb[0].mxu0
      %v1311 = vadd.f32 %v1018, %v1310
      %v1312 = vpop.f32.mrb[0].mxu0
      %1313 = vdwg.mxu0
      %v1314 = vsel %vm1071, %v1308, -inf
      %1315 = vmax.xlane.f32.xlu0 %v1314
      %v1316 = vpop.xlane.xlu0 %1315
      %v1317 = vsel %vm1071, %v1311, -inf
      %1318 = vmax.xlane.f32.xlu0 %v1317
      %v1319 = vpop.xlane.xlu0 %1318
      %v1320 = vsub.f32 %v1308, %v1316
      %v1321 = vsub.f32 %v1311, %v1319
      %v1322 = vmul.f32 %v1320, 1.442695
      %v1323 = vpow.pop %v1322
      %v1324 = vmul.f32 %v1321, 1.442695
      %v1325 = vpow.pop %v1324
      %v1326 = vsel %vm1071, %v1323, 0.0
      %1327 = vadd.xlane.f32.xlu0 %v1326
      %v1328 = vpop.xlane.xlu0 %1327
      %v1329 = vsel %vm1071, %v1325, 0.0
      %1330 = vadd.xlane.f32.xlu0 %v1329
      %v1331 = vpop.xlane.xlu0 %1330
      %v1332 = vrcp.pop %v1328
      %v1333 = vrcp.pop %v1331
      %v1334 = vmul.f32 %v1323, %v1332
      %v1335 = vmul.f32 %v1325, %v1333
      %v1336 = vpack.c.bf16 %v1335, %v1334
      %1337 = vrot.lane.b32.xlu0 %v1013, 48
      %v1338 = vpop.permute.xlu0 %1337
      %v1341 = vsel %vm1071, %v1336, 0
      %1343 = vmatprep.subr.bf16.mxu0 0
      %1344 = vmatpush1.bf16.msra.mxu0 %v1338
      %1345 = vmatprep.subr.bf16.mxu0 0
      %1346 = vmatpush1.bf16.msra.mxu0 0
      %1347 = vmatprep.subr.bf16.mxu0 0
      %1348 = vmatpush1.bf16.msra.mxu0 0
      %1349 = vmatprep.subr.bf16.mxu0 0
      %1350 = vmatpush1.bf16.msra.mxu0 0
      %1351 = vmatprep.subr.bf16.mxu0 0
      %1352 = vmatpush1.bf16.msra.mxu0 0
      %1353 = vmatprep.subr.bf16.mxu0 0
      %1354 = vmatpush1.bf16.msra.mxu0 0
      %1355 = vmatprep.subr.bf16.mxu0 0
      %1356 = vmatpush1.bf16.msra.mxu0 0
      %1357 = vmatprep.subr.bf16.mxu0 0
      %1358 = vmatpush1.bf16.msra.mxu0 0
      %1359 = vmatprep.subr.bf16.mxu0 0
      %1360 = vmatpush1.bf16.msra.mxu0 0
      %1361 = vmatprep.subr.bf16.mxu0 0
      %1362 = vmatpush1.bf16.msra.mxu0 0
      %1363 = vmatprep.subr.bf16.mxu0 0
      %1364 = vmatpush1.bf16.msra.mxu0 0
      %1365 = vmatprep.subr.bf16.mxu0 0
      %1366 = vmatpush1.bf16.msra.mxu0 0
      %1367 = vmatprep.subr.bf16.mxu0 0
      %1368 = vmatpush1.bf16.msra.mxu0 0
      %1369 = vmatprep.subr.bf16.mxu0 0
      %1370 = vmatpush1.bf16.msra.mxu0 0
      %1371 = vmatprep.subr.bf16.mxu0 0
      %1372 = vmatpush1.bf16.msra.mxu0 0
      %1373 = vmatprep.subr.bf16.mxu0 0
      %1374 = vmatpush1.bf16.msra.mxu0 0
      %1375 = vmatprep.mubr.bf16.mxu0 0
      %1376 = vmatmul.mubr.bf16.gmra.mrb[0].mxu0 %v1341
      %v1377 = vpop.f32.mrb[0].mxu0
      %v1378 = vadd.f32 0.0, %v1377
      %v1379 = vpop.f32.mrb[0].mxu0
      %v1380 = vpop.f32.mrb[0].mxu0
      %v1381 = vadd.f32 0.0, %v1380
      %v1382 = vpop.f32.mrb[0].mxu0
      %1383 = vdwg.mxu0
      %1384 = vrot.lane.b32.xlu0 %v1013, 104
      %v1385 = vpop.permute.xlu0 %1384
      %1386 = vrot.lane.b32.xlu0 %v1013, 72
      %v1387 = vpop.permute.xlu0 %1386
      %v1389 = vsel %vm1023, %v1385, 0
      %v1392 = vsel %vm1023, %v1387, 0
      %1394 = vmatprep.subr.bf16.mxu0 0
      %1395 = vmatpush1.bf16.xpose.msra.mxu0 %v1392
      %1396 = vmatprep.subr.bf16.mxu0 0
      %1397 = vmatpush1.bf16.xpose.msra.mxu0 0
      %1398 = vmatprep.subr.bf16.mxu0 0
      %1399 = vmatpush1.bf16.xpose.msra.mxu0 0
      %1400 = vmatprep.subr.bf16.mxu0 0
      %1401 = vmatpush1.bf16.xpose.msra.mxu0 0
      %1402 = vmatprep.subr.bf16.mxu0 0
      %1403 = vmatpush1.bf16.xpose.msra.mxu0 0
      %1404 = vmatprep.subr.bf16.mxu0 0
      %1405 = vmatpush1.bf16.xpose.msra.mxu0 0
      %1406 = vmatprep.subr.bf16.mxu0 0
      %1407 = vmatpush1.bf16.xpose.msra.mxu0 0
      %1408 = vmatprep.subr.bf16.mxu0 0
      %1409 = vmatpush1.bf16.xpose.msra.mxu0 0
      %1410 = vmatprep.subr.bf16.mxu0 0
      %1411 = vmatpush1.bf16.xpose.msra.mxu0 0
      %1412 = vmatprep.subr.bf16.mxu0 0
      %1413 = vmatpush1.bf16.xpose.msra.mxu0 0
      %1414 = vmatprep.subr.bf16.mxu0 0
      %1415 = vmatpush1.bf16.xpose.msra.mxu0 0
      %1416 = vmatprep.subr.bf16.mxu0 0
      %1417 = vmatpush1.bf16.xpose.msra.mxu0 0
      %1418 = vmatprep.subr.bf16.mxu0 0
      %1419 = vmatpush1.bf16.xpose.msra.mxu0 0
      %1420 = vmatprep.subr.bf16.mxu0 0
      %1421 = vmatpush1.bf16.xpose.msra.mxu0 0
      %1422 = vmatprep.subr.bf16.mxu0 0
      %1423 = vmatpush1.bf16.xpose.msra.mxu0 0
      %1424 = vmatprep.subr.bf16.mxu0 0
      %1425 = vmatpush1.bf16.xpose.msra.mxu0 0
      %1426 = vmatprep.mubr.bf16.mxu0 0
      %1427 = vmatmul.mubr.bf16.gmra.mrb[0].mxu0 %v1389
      %v1428 = vpop.f32.mrb[0].mxu0
      %v1429 = vadd.f32 %v1018, %v1428
      %v1430 = vpop.f32.mrb[0].mxu0
      %v1431 = vpop.f32.mrb[0].mxu0
      %v1432 = vadd.f32 %v1018, %v1431
      %v1433 = vpop.f32.mrb[0].mxu0
      %1434 = vdwg.mxu0
      %v1435 = vsel %vm1071, %v1429, -inf
      %1436 = vmax.xlane.f32.xlu0 %v1435
      %v1437 = vpop.xlane.xlu0 %1436
      %v1438 = vsel %vm1071, %v1432, -inf
      %1439 = vmax.xlane.f32.xlu0 %v1438
      %v1440 = vpop.xlane.xlu0 %1439
      %v1441 = vsub.f32 %v1429, %v1437
      %v1442 = vsub.f32 %v1432, %v1440
      %v1443 = vmul.f32 %v1441, 1.442695
      %v1444 = vpow.pop %v1443
      %v1445 = vmul.f32 %v1442, 1.442695
      %v1446 = vpow.pop %v1445
      %v1447 = vsel %vm1071, %v1444, 0.0
      %1448 = vadd.xlane.f32.xlu0 %v1447
      %v1449 = vpop.xlane.xlu0 %1448
      %v1450 = vsel %vm1071, %v1446, 0.0
      %1451 = vadd.xlane.f32.xlu0 %v1450
      %v1452 = vpop.xlane.xlu0 %1451
      %v1453 = vrcp.pop %v1449
      %v1454 = vrcp.pop %v1452
      %v1455 = vmul.f32 %v1444, %v1453
      %v1456 = vmul.f32 %v1446, %v1454
      %v1457 = vpack.c.bf16 %v1456, %v1455
      %1458 = vrot.lane.b32.xlu0 %v1013, 40
      %v1459 = vpop.permute.xlu0 %1458
      %v1462 = vsel %vm1071, %v1457, 0
      %1464 = vmatprep.subr.bf16.mxu0 0
      %1465 = vmatpush1.bf16.msra.mxu0 %v1459
      %1466 = vmatprep.subr.bf16.mxu0 0
      %1467 = vmatpush1.bf16.msra.mxu0 0
      %1468 = vmatprep.subr.bf16.mxu0 0
      %1469 = vmatpush1.bf16.msra.mxu0 0
      %1470 = vmatprep.subr.bf16.mxu0 0
      %1471 = vmatpush1.bf16.msra.mxu0 0
      %1472 = vmatprep.subr.bf16.mxu0 0
      %1473 = vmatpush1.bf16.msra.mxu0 0
      %1474 = vmatprep.subr.bf16.mxu0 0
      %1475 = vmatpush1.bf16.msra.mxu0 0
      %1476 = vmatprep.subr.bf16.mxu0 0
      %1477 = vmatpush1.bf16.msra.mxu0 0
      %1478 = vmatprep.subr.bf16.mxu0 0
      %1479 = vmatpush1.bf16.msra.mxu0 0
      %1480 = vmatprep.subr.bf16.mxu0 0
      %1481 = vmatpush1.bf16.msra.mxu0 0
      %1482 = vmatprep.subr.bf16.mxu0 0
      %1483 = vmatpush1.bf16.msra.mxu0 0
      %1484 = vmatprep.subr.bf16.mxu0 0
      %1485 = vmatpush1.bf16.msra.mxu0 0
      %1486 = vmatprep.subr.bf16.mxu0 0
      %1487 = vmatpush1.bf16.msra.mxu0 0
      %1488 = vmatprep.subr.bf16.mxu0 0
      %1489 = vmatpush1.bf16.msra.mxu0 0
      %1490 = vmatprep.subr.bf16.mxu0 0
      %1491 = vmatpush1.bf16.msra.mxu0 0
      %1492 = vmatprep.subr.bf16.mxu0 0
      %1493 = vmatpush1.bf16.msra.mxu0 0
      %1494 = vmatprep.subr.bf16.mxu0 0
      %1495 = vmatpush1.bf16.msra.mxu0 0
      %1496 = vmatprep.mubr.bf16.mxu0 0
      %1497 = vmatmul.mubr.bf16.gmra.mrb[0].mxu0 %v1462
      %v1498 = vpop.f32.mrb[0].mxu0
      %v1499 = vadd.f32 0.0, %v1498
      %v1500 = vpop.f32.mrb[0].mxu0
      %v1501 = vpop.f32.mrb[0].mxu0
      %v1502 = vadd.f32 0.0, %v1501
      %v1503 = vpop.f32.mrb[0].mxu0
      %1504 = vdwg.mxu0
      %1507 = vrot.lane.b32.xlu0 %v1257, 8
      %v1508 = vpop.permute.xlu0 %1507
      %1509 = vrot.lane.b32.xlu0 %v1260, 8
      %v1510 = vpop.permute.xlu0 %1509
      %1515 = vrot.lane.b32.xlu0 %v1378, 16
      %v1516 = vpop.permute.xlu0 %1515
      %1517 = vrot.lane.b32.xlu0 %v1381, 16
      %v1518 = vpop.permute.xlu0 %1517
      %1523 = vrot.lane.b32.xlu0 %v1499, 24
      %v1524 = vpop.permute.xlu0 %1523
      %1525 = vrot.lane.b32.xlu0 %v1502, 24
      %v1526 = vpop.permute.xlu0 %1525
      %v1529 = vsel %vm1023, %v1136, %v1508
      %v1530 = vsel %vm1023, %v1139, %v1510
      %v1531 = vsel %vm1071, %v1529, %v1516
      %v1532 = vsel %vm1071, %v1530, %v1518
      %vm1533 = vcmask 195584
      %v1534 = vsel %vm1533, %v1531, %v1524
      %v1535 = vsel %vm1533, %v1532, %v1526
      %v1536 = vpack.c.bf16 %v1535, %v1534
      %v1537 = vld [vmem:[%s832] sm:$0xf]
      %v1538 = vld [vmem:[%s832 + $0x4] sm:$0xf]
      %v1539 = vld [vmem:[%s832 + $0x8] sm:$0xf]
      %v1540 = vld [vmem:[%s832 + $0xc] sm:$0xf]
      %v1541 = vld [vmem:[%s835] sm:$0x1]
      %v1543 = vlaneseq
      %v1544 = vshrl.u32 %v1543, 7
      %v1545 = vsub.s32 0, %v1544
      %v1546 = vrot.slane %v1541, %v1545
      %v1552 = vunpack.c.l.b16 %v1537
      %v1553 = vunpack.c.l.b16 %v1538
      %v1554 = vunpack.c.l.b16 %v1539
      %v1555 = vunpack.c.l.b16 %v1540
      %v1556 = vpack.c.b16 %v1553, %v1552
      %v1557 = vpack.c.b16 %v1555, %v1554
      %v1561 = vsel %vm887, %v1536, 0
      %1563 = vmatprep.subr.bf16.mxu0 0
      %1564 = vmatpush1.bf16.msra.mxu0 %v1556
      %1565 = vmatprep.subr.bf16.mxu0 0
      %1566 = vmatpush1.bf16.msra.mxu0 %v1557
      %1567 = vmatprep.subr.bf16.mxu0 0
      %1568 = vmatpush1.bf16.msra.mxu0 0
      %1569 = vmatprep.subr.bf16.mxu0 0
      %1570 = vmatpush1.bf16.msra.mxu0 0
      %1571 = vmatprep.subr.bf16.mxu0 0
      %1572 = vmatpush1.bf16.msra.mxu0 0
      %1573 = vmatprep.subr.bf16.mxu0 0
      %1574 = vmatpush1.bf16.msra.mxu0 0
      %1575 = vmatprep.subr.bf16.mxu0 0
      %1576 = vmatpush1.bf16.msra.mxu0 0
      %1577 = vmatprep.subr.bf16.mxu0 0
      %1578 = vmatpush1.bf16.msra.mxu0 0
      %1579 = vmatprep.subr.bf16.mxu0 0
      %1580 = vmatpush1.bf16.msra.mxu0 0
      %1581 = vmatprep.subr.bf16.mxu0 0
      %1582 = vmatpush1.bf16.msra.mxu0 0
      %1583 = vmatprep.subr.bf16.mxu0 0
      %1584 = vmatpush1.bf16.msra.mxu0 0
      %1585 = vmatprep.subr.bf16.mxu0 0
      %1586 = vmatpush1.bf16.msra.mxu0 0
      %1587 = vmatprep.subr.bf16.mxu0 0
      %1588 = vmatpush1.bf16.msra.mxu0 0
      %1589 = vmatprep.subr.bf16.mxu0 0
      %1590 = vmatpush1.bf16.msra.mxu0 0
      %1591 = vmatprep.subr.bf16.mxu0 0
      %1592 = vmatpush1.bf16.msra.mxu0 0
      %1593 = vmatprep.subr.bf16.mxu0 0
      %1594 = vmatpush1.bf16.msra.mxu0 0
      %1595 = vmatprep.mubr.bf16.mxu0 0
      %1596 = vmatmul.mubr.bf16.gmra.mrb[0].mxu0 %v1561
      %v1597 = vpop.f32.mrb[0].mxu0
      %v1598 = vadd.f32 %v1546, %v1597
      %v1599 = vpop.f32.mrb[0].mxu0
      %v1600 = vpop.f32.mrb[0].mxu0
      %v1601 = vadd.f32 %v1546, %v1600
      %v1602 = vpop.f32.mrb[0].mxu0
      %1603 = vdwg.mxu0
      %v1604 = vadd.f32 %v882, %v1598
      %v1605 = vadd.f32 %v883, %v1601
      %v1606 = vld [vmem:[%s838] sm:$0x1]
      %v1607 = vld [vmem:[%s841] sm:$0x1]
      %v1608 = vsel %vm887, %v1604, 0.0
      %1609 = vadd.xlane.f32.xlu0 %v1608
      %v1610 = vpop.xlane.xlu0 %1609
      %v1611 = vsel %vm887, %v1605, 0.0
      %1612 = vadd.xlane.f32.xlu0 %v1611
      %v1613 = vpop.xlane.xlu0 %1612
      %v1614 = vmul.f32 %v1610, %v894
      %v1615 = vmul.f32 %v1613, %v894
      %v1616 = vsub.f32 %v1604, %v1614
      %v1617 = vsub.f32 %v1605, %v1615
      %v1618 = vmul.f32 %v1616, %v1616
      %v1619 = vmul.f32 %v1617, %v1617
      %v1620 = vsel %vm887, %v1618, 0.0
      %1621 = vadd.xlane.f32.xlu0 %v1620
      %v1622 = vpop.xlane.xlu0 %1621
      %v1623 = vsel %vm887, %v1619, 0.0
      %1624 = vadd.xlane.f32.xlu0 %v1623
      %v1625 = vpop.xlane.xlu0 %1624
      %v1626 = vmul.f32 %v1622, 0.032258064
      %v1627 = vmul.f32 %v1625, 0.032258064
      %v1628 = vrsqrt.pop %v1626
      %v1629 = vmul.f32 %v1626, %v1628
      %vm1630 = vcmp.eq.f32.partialorder %v1626, inf
      %v1631 = vsel %vm1630, %v1626, %v1629
      %vm1632 = vcmp.eq.f32.partialorder %v1626, 0.0
      %v1633 = vand.u32 %v1626, 2147483648
      %v1634 = vsel %vm1632, %v1633, %v1631
      %v1635 = vrsqrt.pop %v1627
      %v1636 = vmul.f32 %v1627, %v1635
      %vm1637 = vcmp.eq.f32.partialorder %v1627, inf
      %v1638 = vsel %vm1637, %v1627, %v1636
      %vm1639 = vcmp.eq.f32.partialorder %v1627, 0.0
      %v1640 = vand.u32 %v1627, 2147483648
      %v1641 = vsel %vm1639, %v1640, %v1638
      %v1642 = vadd.f32 %v1634, 1e-06
      %v1643 = vadd.f32 %v1641, 1e-06
      %v1644 = vrcp.pop %v1642
      %v1645 = vrcp.pop %v1643
      %v1646 = vmul.f32 %v1616, %v1644
      %v1647 = vmul.f32 %v1617, %v1645
      %v1649 = vlaneseq
      %v1650 = vshrl.u32 %v1649, 7
      %v1651 = vsub.s32 0, %v1650
      %v1652 = vrot.slane %v1606, %v1651
      %v1654 = vmul.f32 %v1652, %v1646
      %v1655 = vmul.f32 %v1652, %v1647
      %v1657 = vlaneseq
      %v1658 = vshrl.u32 %v1657, 7
      %v1659 = vsub.s32 0, %v1658
      %v1660 = vrot.slane %v1607, %v1659
      %v1662 = vadd.f32 %v1654, %v1660
      %v1663 = vadd.f32 %v1655, %v1660
      %v1664 = vpack.c.bf16 %v1663, %v1662
      %v1665 = vld [vmem:[%s846] sm:$0xf]
      %v1666 = vld [vmem:[%s846 + $0x4] sm:$0xf]
      %v1667 = vld [vmem:[%s846 + $0x8] sm:$0xf]
      %v1668 = vld [vmem:[%s846 + $0xc] sm:$0xf]
      %v1669 = vld [vmem:[%s849] sm:$0x1]
      %v1671 = vlaneseq
      %v1672 = vshrl.u32 %v1671, 7
      %v1673 = vsub.s32 0, %v1672
      %v1674 = vrot.slane %v1669, %v1673
      %v1680 = vunpack.c.l.b16 %v1665
      %v1681 = vunpack.c.l.b16 %v1666
      %v1682 = vunpack.c.l.b16 %v1667
      %v1683 = vunpack.c.l.b16 %v1668
      %v1684 = vpack.c.b16 %v1681, %v1680
      %v1685 = vpack.c.b16 %v1683, %v1682
      %v1689 = vsel %vm887, %v1664, 0
      %1691 = vmatprep.subr.bf16.mxu0 0
      %1692 = vmatpush1.bf16.msra.mxu0 %v1684
      %1693 = vmatprep.subr.bf16.mxu0 0
      %1694 = vmatpush1.bf16.msra.mxu0 %v1685
      %1695 = vmatprep.subr.bf16.mxu0 0
      %1696 = vmatpush1.bf16.msra.mxu0 0
      %1697 = vmatprep.subr.bf16.mxu0 0
      %1698 = vmatpush1.bf16.msra.mxu0 0
      %1699 = vmatprep.subr.bf16.mxu0 0
      %1700 = vmatpush1.bf16.msra.mxu0 0
      %1701 = vmatprep.subr.bf16.mxu0 0
      %1702 = vmatpush1.bf16.msra.mxu0 0
      %1703 = vmatprep.subr.bf16.mxu0 0
      %1704 = vmatpush1.bf16.msra.mxu0 0
      %1705 = vmatprep.subr.bf16.mxu0 0
      %1706 = vmatpush1.bf16.msra.mxu0 0
      %1707 = vmatprep.subr.bf16.mxu0 0
      %1708 = vmatpush1.bf16.msra.mxu0 0
      %1709 = vmatprep.subr.bf16.mxu0 0
      %1710 = vmatpush1.bf16.msra.mxu0 0
      %1711 = vmatprep.subr.bf16.mxu0 0
      %1712 = vmatpush1.bf16.msra.mxu0 0
      %1713 = vmatprep.subr.bf16.mxu0 0
      %1714 = vmatpush1.bf16.msra.mxu0 0
      %1715 = vmatprep.subr.bf16.mxu0 0
      %1716 = vmatpush1.bf16.msra.mxu0 0
      %1717 = vmatprep.subr.bf16.mxu0 0
      %1718 = vmatpush1.bf16.msra.mxu0 0
      %1719 = vmatprep.subr.bf16.mxu0 0
      %1720 = vmatpush1.bf16.msra.mxu0 0
      %1721 = vmatprep.subr.bf16.mxu0 0
      %1722 = vmatpush1.bf16.msra.mxu0 0
      %1723 = vmatprep.mubr.bf16.mxu0 0
      %1724 = vmatmul.mubr.bf16.gmra.mrb[0].mxu0 %v1689
      %v1725 = vpop.f32.mrb[0].mxu0
      %v1726 = vadd.f32 %v1674, %v1725
      %v1727 = vpop.f32.mrb[0].mxu0
      %v1728 = vpop.f32.mrb[0].mxu0
      %v1729 = vadd.f32 %v1674, %v1728
      %v1730 = vpop.f32.mrb[0].mxu0
      %1731 = vdwg.mxu0
      %v1732 = vmax.f32 %v1726, 0.0
      %v1733 = vmax.f32 %v1729, 0.0
      %v1734 = vpack.c.bf16 %v1733, %v1732
      %v1735 = vld [vmem:[%s854] sm:$0xf]
      %v1736 = vld [vmem:[%s854 + $0x4] sm:$0xf]
      %v1737 = vld [vmem:[%s854 + $0x8] sm:$0xf]
      %v1738 = vld [vmem:[%s854 + $0xc] sm:$0xf]
      %v1739 = vld [vmem:[%s854 + $0x10] sm:$0xf]
      %v1740 = vld [vmem:[%s854 + $0x14] sm:$0xf]
      %v1741 = vld [vmem:[%s854 + $0x18] sm:$0xf]
      %v1742 = vld [vmem:[%s854 + $0x1c] sm:$0xf]
      %v1743 = vld [vmem:[%s857] sm:$0x1]
      %v1745 = vlaneseq
      %v1746 = vshrl.u32 %v1745, 7
      %v1747 = vsub.s32 0, %v1746
      %v1748 = vrot.slane %v1743, %v1747
      %v1758 = vunpack.c.l.b16 %v1735
      %v1759 = vunpack.c.l.b16 %v1736
      %v1760 = vunpack.c.l.b16 %v1737
      %v1761 = vunpack.c.l.b16 %v1738
      %v1762 = vunpack.c.l.b16 %v1739
      %v1763 = vunpack.c.l.b16 %v1740
      %v1764 = vunpack.c.l.b16 %v1741
      %v1765 = vunpack.c.l.b16 %v1742
      %v1766 = vpack.c.b16 %v1759, %v1758
      %v1767 = vpack.c.b16 %v1761, %v1760
      %v1768 = vpack.c.b16 %v1763, %v1762
      %v1769 = vpack.c.b16 %v1765, %v1764
      %vm1774 = vcmask 523264
      %v1776 = vsel %vm1774, %v1734, 0
      %1778 = vmatprep.subr.bf16.mxu0 0
      %1779 = vmatpush1.bf16.msra.mxu0 %v1766
      %1780 = vmatprep.subr.bf16.mxu0 0
      %1781 = vmatpush1.bf16.msra.mxu0 %v1767
      %1782 = vmatprep.subr.bf16.mxu0 0
      %1783 = vmatpush1.bf16.msra.mxu0 %v1768
      %1784 = vmatprep.subr.bf16.mxu0 0
      %1785 = vmatpush1.bf16.msra.mxu0 %v1769
      %1786 = vmatprep.subr.bf16.mxu0 0
      %1787 = vmatpush1.bf16.msra.mxu0 0
      %1788 = vmatprep.subr.bf16.mxu0 0
      %1789 = vmatpush1.bf16.msra.mxu0 0
      %1790 = vmatprep.subr.bf16.mxu0 0
      %1791 = vmatpush1.bf16.msra.mxu0 0
      %1792 = vmatprep.subr.bf16.mxu0 0
      %1793 = vmatpush1.bf16.msra.mxu0 0
      %1794 = vmatprep.subr.bf16.mxu0 0
      %1795 = vmatpush1.bf16.msra.mxu0 0
      %1796 = vmatprep.subr.bf16.mxu0 0
      %1797 = vmatpush1.bf16.msra.mxu0 0
      %1798 = vmatprep.subr.bf16.mxu0 0
      %1799 = vmatpush1.bf16.msra.mxu0 0
      %1800 = vmatprep.subr.bf16.mxu0 0
      %1801 = vmatpush1.bf16.msra.mxu0 0
      %1802 = vmatprep.subr.bf16.mxu0 0
      %1803 = vmatpush1.bf16.msra.mxu0 0
      %1804 = vmatprep.subr.bf16.mxu0 0
      %1805 = vmatpush1.bf16.msra.mxu0 0
      %1806 = vmatprep.subr.bf16.mxu0 0
      %1807 = vmatpush1.bf16.msra.mxu0 0
      %1808 = vmatprep.subr.bf16.mxu0 0
      %1809 = vmatpush1.bf16.msra.mxu0 0
      %1810 = vmatprep.mubr.bf16.mxu0 0
      %1811 = vmatmul.mubr.bf16.gmra.mrb[0].mxu0 %v1776
      %v1812 = vpop.f32.mrb[0].mxu0
      %v1813 = vadd.f32 %v1748, %v1812
      %v1814 = vpop.f32.mrb[0].mxu0
      %v1815 = vpop.f32.mrb[0].mxu0
      %v1816 = vadd.f32 %v1748, %v1815
      %v1817 = vpop.f32.mrb[0].mxu0
      %1818 = vdwg.mxu0
      %v1819 = vadd.f32 %v1604, %v1813
      %v1820 = vadd.f32 %v1605, %v1816
      %1821 = vst.msk [vmem:[#allocation2] sm:$0xff] %vm887, %v1819
      %1822 = vst.msk [vmem:[#allocation2 + $0x8] sm:$0xff] %vm887, %v1820
      %p1823 = scmp.eq.s32.totalorder %s36, 1
      // Predicated region
      $region105: #{encoder_forward.1} parent=99 // pred_check
        %p1824 = pneg %p1823
      $region106: #{encoder_forward.1} parent=99 // pred_check_branch
        %1826 = sbr.rel (%p1824) target = $region108
      $region107: #{encoder_forward.1} parent=99 // pred_region
        %v1827 = vld [vmem:[%s15] sm:$0x1]
        %v1828 = vld [vmem:[%s16] sm:$0x1]
        %v1829 = vsel %vm887, %v1819, 0.0
        %1830 = vadd.xlane.f32.xlu0 %v1829
        %v1831 = vpop.xlane.xlu0 %1830
        %v1832 = vsel %vm887, %v1820, 0.0
        %1833 = vadd.xlane.f32.xlu0 %v1832
        %v1834 = vpop.xlane.xlu0 %1833
        %v1835 = vmul.f32 %v1831, %v894
        %v1836 = vmul.f32 %v1834, %v894
        %v1837 = vsub.f32 %v1819, %v1835
        %v1838 = vsub.f32 %v1820, %v1836
        %v1839 = vmul.f32 %v1837, %v1837
        %v1840 = vmul.f32 %v1838, %v1838
        %v1841 = vsel %vm887, %v1839, 0.0
        %1842 = vadd.xlane.f32.xlu0 %v1841
        %v1843 = vpop.xlane.xlu0 %1842
        %v1844 = vsel %vm887, %v1840, 0.0
        %1845 = vadd.xlane.f32.xlu0 %v1844
        %v1846 = vpop.xlane.xlu0 %1845
        %v1847 = vmul.f32 %v1843, 0.032258064
        %v1848 = vmul.f32 %v1846, 0.032258064
        %v1849 = vrsqrt.pop %v1847
        %v1850 = vmul.f32 %v1847, %v1849
        %vm1851 = vcmp.eq.f32.partialorder %v1847, inf
        %v1852 = vsel %vm1851, %v1847, %v1850
        %vm1853 = vcmp.eq.f32.partialorder %v1847, 0.0
        %v1854 = vand.u32 %v1847, 2147483648
        %v1855 = vsel %vm1853, %v1854, %v1852
        %v1856 = vrsqrt.pop %v1848
        %v1857 = vmul.f32 %v1848, %v1856
        %vm1858 = vcmp.eq.f32.partialorder %v1848, inf
        %v1859 = vsel %vm1858, %v1848, %v1857
        %vm1860 = vcmp.eq.f32.partialorder %v1848, 0.0
        %v1861 = vand.u32 %v1848, 2147483648
        %v1862 = vsel %vm1860, %v1861, %v1859
        %v1863 = vadd.f32 %v1855, 1e-06
        %v1864 = vadd.f32 %v1862, 1e-06
        %v1865 = vrcp.pop %v1863
        %v1866 = vrcp.pop %v1864
        %v1867 = vmul.f32 %v1837, %v1865
        %v1868 = vmul.f32 %v1838, %v1866
        %v1870 = vlaneseq
        %v1871 = vshrl.u32 %v1870, 7
        %v1872 = vsub.s32 0, %v1871
        %v1873 = vrot.slane %v1827, %v1872
        %v1875 = vmul.f32 %v1873, %v1867
        %v1876 = vmul.f32 %v1873, %v1868
        %v1878 = vlaneseq
        %v1879 = vshrl.u32 %v1878, 7
        %v1880 = vsub.s32 0, %v1879
        %v1881 = vrot.slane %v1828, %v1880
        %v1883 = vadd.f32 %v1875, %v1881
        %v1884 = vadd.f32 %v1876, %v1881
        %v1885 = vpack.c.bf16 %v1884, %v1883
        %v1886 = vld [vmem:[%s17] sm:$0xf]
        %v1887 = vld [vmem:[%s17 + $0x4] sm:$0xf]
        %v1888 = vld [vmem:[%s17 + $0x8] sm:$0xf]
        %v1889 = vld [vmem:[%s17 + $0xc] sm:$0xf]
        %v1890 = vld [vmem:[%s18] sm:$0x1]
        %v1892 = vlaneseq
        %v1893 = vshrl.u32 %v1892, 7
        %v1894 = vsub.s32 0, %v1893
        %v1895 = vrot.slane %v1890, %v1894
        %v1901 = vunpack.c.l.b16 %v1886
        %v1902 = vunpack.c.l.b16 %v1887
        %v1903 = vunpack.c.l.b16 %v1888
        %v1904 = vunpack.c.l.b16 %v1889
        %v1905 = vpack.c.b16 %v1902, %v1901
        %v1906 = vpack.c.b16 %v1904, %v1903
        %v1910 = vsel %vm887, %v1885, 0
        %1912 = vmatprep.subr.bf16.mxu0 0
        %1913 = vmatpush1.bf16.msra.mxu0 %v1905
        %1914 = vmatprep.subr.bf16.mxu0 0
        %1915 = vmatpush1.bf16.msra.mxu0 %v1906
        %1916 = vmatprep.subr.bf16.mxu0 0
        %1917 = vmatpush1.bf16.msra.mxu0 0
        %1918 = vmatprep.subr.bf16.mxu0 0
        %1919 = vmatpush1.bf16.msra.mxu0 0
        %1920 = vmatprep.subr.bf16.mxu0 0
        %1921 = vmatpush1.bf16.msra.mxu0 0
        %1922 = vmatprep.subr.bf16.mxu0 0
        %1923 = vmatpush1.bf16.msra.mxu0 0
        %1924 = vmatprep.subr.bf16.mxu0 0
        %1925 = vmatpush1.bf16.msra.mxu0 0
        %1926 = vmatprep.subr.bf16.mxu0 0
        %1927 = vmatpush1.bf16.msra.mxu0 0
        %1928 = vmatprep.subr.bf16.mxu0 0
        %1929 = vmatpush1.bf16.msra.mxu0 0
        %1930 = vmatprep.subr.bf16.mxu0 0
        %1931 = vmatpush1.bf16.msra.mxu0 0
        %1932 = vmatprep.subr.bf16.mxu0 0
        %1933 = vmatpush1.bf16.msra.mxu0 0
        %1934 = vmatprep.subr.bf16.mxu0 0
        %1935 = vmatpush1.bf16.msra.mxu0 0
        %1936 = vmatprep.subr.bf16.mxu0 0
        %1937 = vmatpush1.bf16.msra.mxu0 0
        %1938 = vmatprep.subr.bf16.mxu0 0
        %1939 = vmatpush1.bf16.msra.mxu0 0
        %1940 = vmatprep.subr.bf16.mxu0 0
        %1941 = vmatpush1.bf16.msra.mxu0 0
        %1942 = vmatprep.subr.bf16.mxu0 0
        %1943 = vmatpush1.bf16.msra.mxu0 0
        %1944 = vmatprep.mubr.bf16.mxu0 0
        %1945 = vmatmul.mubr.bf16.gmra.mrb[0].mxu0 %v1910
        %v1946 = vpop.f32.mrb[0].mxu0
        %v1947 = vadd.f32 %v1895, %v1946
        %v1948 = vpop.f32.mrb[0].mxu0
        %v1949 = vpop.f32.mrb[0].mxu0
        %v1950 = vadd.f32 %v1895, %v1949
        %v1951 = vpop.f32.mrb[0].mxu0
        %1952 = vdwg.mxu0
        %v1953 = vld [vmem:[%s862] sm:$0xff]
        %v1954 = vld [vmem:[%s862 + $0x8] sm:$0xff]
        %v1955 = vmul.f32 %v1947, 0.5
        %v1956 = vmul.f32 %v1950, 0.5
        %v1957 = vmul.f32 %v1955, 1.442695
        %v1958 = vpow.pop %v1957
        %v1959 = vmul.f32 %v1956, 1.442695
        %v1960 = vpow.pop %v1959
        %1963 = vrot.lane.b32.xlu0 %v1958, 112
        %v1964 = vpop.permute.xlu0 %1963
        %1965 = vrot.lane.b32.xlu0 %v1960, 112
        %v1966 = vpop.permute.xlu0 %1965
        %v1969 = vmul.f32 %v1953, %v1964
        %v1970 = vmul.f32 %v1954, %v1966
        %v1971 = vadd.f32 %v1969, %v1947
        %v1972 = vadd.f32 %v1970, %v1950
        %1975 = vrot.lane.b32.xlu0 %v1947, 16
        %v1976 = vpop.permute.xlu0 %1975
        %1977 = vrot.lane.b32.xlu0 %v1950, 16
        %v1978 = vpop.permute.xlu0 %1977
        %v1981 = vsel %vm1071, %v1971, %v1976
        %v1982 = vsel %vm1071, %v1972, %v1978
        %v1983 = vsel %vm887, %v1981, %v1976
        %v1984 = vsel %vm887, %v1982, %v1978
        %vm1985 = vcmask 392192
        %1986 = vst.msk [vmem:[%s867] sm:$0xff] %vm1985, %v1983
        %1987 = vst.msk [vmem:[%s867 + $0x8] sm:$0xff] %vm1985, %v1984
      $region108: #{encoder_forward.1} parent=99 // pred_fallthru
        _
      %p1988 = scmp.lt.s32.totalorder %s35, 1
      %s1989 = scalar_select %p1988, %s35, 1
      %s1990 = smul.addr %s1989, 2
      %s1991 = smul.addr %s1990, 8
      %s1992 = scalar_lea.vmem %s20, %s1991
      // Predicated region
      $region109: #{encoder_forward.1} parent=99 // pred_check
        %p1993 = pneg %p556
      $region110: #{encoder_forward.1} parent=99 // pred_check_branch
        %1995 = sbr.rel (%p1993) target = $region112
      $region111: #{encoder_forward.1} parent=99 // pred_region
        _
      $region112: #{encoder_forward.1} parent=99 // pred_fallthru
        _
    $region100: #{encoder_forward.1} parent=5 // pred_fallthru
      _
    %p1996 = scmp.le.s32.totalorder 2, %s26
    // Predicated region
    $region113: #{encoder_forward.1} parent=5 // pred_check
      %p1997 = pneg %p1996
    $region114: #{encoder_forward.1} parent=5 // pred_check_branch
      %1999 = sbr.rel (%p1997) target = $region116
    $region115: #{encoder_forward.1} parent=5 // pred_region
      %s2000 = ssub.s32 %s26, 2
      // Predicated region
      $region117: #{encoder_forward.1} parent=115 // pred_check
        %p2001 = pneg %p562
      $region118: #{encoder_forward.1} parent=115 // pred_check_branch
        %2003 = sbr.rel (%p2001) target = $region120
      $region119: #{encoder_forward.1} parent=115 // pred_region
        %p2004 = scmp.lt.s32.totalorder %s37, 1
        %s2005 = scalar_select %p2004, %s37, 1
        %s2006 = smul.addr %s2005, 2
        %s2007 = smul.addr %s2006, 8
        %s2008 = scalar_lea.vmem %s20, %s2007
      $region120: #{encoder_forward.1} parent=115 // pred_fallthru
        _
    $region116: #{encoder_forward.1} parent=5 // pred_fallthru
      _
  $region6: #{encoder_forward.1} parent=0 // loop_footer
    %s30 = sadd.s32 1, %s26
  $region7: #{encoder_forward.1} parent=0 // loop_footer_branch
    %25 = sbr.rel target = $region3
  $region8: #{encoder_forward.1} parent=0 // loop_exit
    _

</llo_original>
